<compile_context>
chip_gen: v5e
topology: v5e:2x2
jax: 0.10.0
libtpu: 0.0.40
codegen_flags: <defaults>
</compile_context>

<pallas_src>
import functools

import jax
import jax.numpy as jnp
from jax import lax
from jax.experimental import pallas as pl
from jax.experimental.pallas import tpu as pltpu


# ---------------------------------------------------------------------------
# Small in-kernel helpers
# ---------------------------------------------------------------------------
def _softmax_last(x):
    m = jnp.max(x, axis=-1, keepdims=True)
    e = jnp.exp(x - m)
    return e * pl.reciprocal(jnp.sum(e, axis=-1, keepdims=True), approx=False)


# ---------------------------------------------------------------------------
# Attention kernel: whole-batch self-attention mixing (att_dim > 0 path)
#   att1 = softmax(x @ W1 + b1); att2 = softmax(x @ W2 + b2)
#   anc  = x + (att1 @ att2^T) @ (x @ W3 + b3)
# Projections are flattened to (B*T, E) so the MXU sees large dense matmuls;
# only the score / mixing products are batched per-b einsums.
# ---------------------------------------------------------------------------
def attn_kernel(x_ref, w1_ref, b1_ref, w2_ref, b2_ref, w3_ref, b3_ref, o_ref):
    B, T, E = x_ref.shape
    A = w1_ref.shape[1]

    x = x_ref[...]                                   # (B, T, E)
    x2d = x.reshape(B * T, E)                        # lane-dense projections

    a1 = _softmax_last(
        jnp.dot(x2d, w1_ref[...], preferred_element_type=jnp.float32)
        + b1_ref[...]).reshape(B, T, A)
    a2 = _softmax_last(
        jnp.dot(x2d, w2_ref[...], preferred_element_type=jnp.float32)
        + b2_ref[...]).reshape(B, T, A)
    xw3 = (jnp.dot(x2d, w3_ref[...], preferred_element_type=jnp.float32)
           + b3_ref[...]).reshape(B, T, E)

    # TODO(synk): for very long sequences the (B, T, T) score tensor should be
    #             tiled flash-style to respect v7x's 64 MiB VMEM.
    scores = jnp.einsum("bta,bsa->bts", a1, a2,
                        preferred_element_type=jnp.float32)   # (B, T, T)
    x_b = jnp.einsum("bts,bse->bte", scores, xw3,
                     preferred_element_type=jnp.float32)      # (B, T, E)

    o_ref[...] = (x + x_b).astype(o_ref.dtype)


def attention(x, w1, b1, w2, b2, w3, b3):
    B, T, E = x.shape
    A = w1.shape[1]
    return pl.pallas_call(
        attn_kernel,
        out_shape=jax.ShapeDtypeStruct((B, T, E), x.dtype),
        grid_spec=pltpu.PrefetchScalarGridSpec(
            num_scalar_prefetch=0,
            grid=(1,),
            in_specs=[
                pl.BlockSpec((B, T, E), lambda i: (0, 0, 0)),
                pl.BlockSpec((E, A), lambda i: (0, 0)),
                pl.BlockSpec((1, A), lambda i: (0, 0)),
                pl.BlockSpec((E, A), lambda i: (0, 0)),
                pl.BlockSpec((1, A), lambda i: (0, 0)),
                pl.BlockSpec((E, E), lambda i: (0, 0)),
                pl.BlockSpec((1, E), lambda i: (0, 0)),
            ],
            out_specs=pl.BlockSpec((B, T, E), lambda i: (0, 0, 0)),
        ),
        compiler_params=pltpu.CompilerParams(dimension_semantics=("arbitrary",)),
    )(x, w1, b1, w2, b2, w3, b3)


# ---------------------------------------------------------------------------
# LSTM + out2label kernel (time-major input, zero initial hidden/cell state)
#   gate order follows PyTorch: [i, f, g, o].
#   H is pre-padded to a multiple of 128 so gate slices are lane-aligned.
# ---------------------------------------------------------------------------
def lstm_kernel(x_ref, wih_ref, whh_ref, b_ref, wout_ref, bout_ref, out_ref,
                gx_sc, hist_sc):
    T, Bblk, E = x_ref.shape
    Hp4 = wih_ref.shape[1]
    Hp = Hp4 // 4
    C = wout_ref.shape[1]

    # ---- hoisted input projection: one big MXU matmul + bias (added once) ----
    x2d = x_ref[...].reshape(T * Bblk, E)                      # (T*B, E)
    gx = (jnp.dot(x2d, wih_ref[...], preferred_element_type=jnp.float32)
          + b_ref[...])                                        # (T*B, 4Hp)
    gx_sc[...] = gx.reshape(T, Bblk, Hp4)

    whh = whh_ref[...]                                         # read once

    def step(t, carry):
        h, c = carry
        gates = gx_sc[t] + jnp.dot(h, whh,
                                   preferred_element_type=jnp.float32)  # (B,4Hp)
        i_g = jax.nn.sigmoid(gates[:, 0 * Hp:1 * Hp])
        f_g = jax.nn.sigmoid(gates[:, 1 * Hp:2 * Hp])
        g_g = jnp.tanh(gates[:, 2 * Hp:3 * Hp])
        o_g = jax.nn.sigmoid(gates[:, 3 * Hp:4 * Hp])
        c_new = f_g * c + i_g * g_g
        h_new = o_g * jnp.tanh(c_new)
        hist_sc[t] = h_new
        return (h_new, c_new)

    h0 = jnp.zeros((Bblk, Hp), jnp.float32)
    c0 = jnp.zeros((Bblk, Hp), jnp.float32)
    if T <= 32:
        # Fully unrolled straight-line recurrence (static indices, scheduler
        # can overlap h@W_hh MXU latency with gate VPU/EUP work).
        carry = (h0, c0)
        for t in range(T):
            carry = step(t, carry)
    else:
        lax.fori_loop(0, T, step, (h0, c0))

    # ---- hoisted output projection: one matmul + one bulk store -------------
    h_all = hist_sc[...].reshape(T * Bblk, Hp)                 # (T*B, Hp)
    labels = (jnp.dot(h_all, wout_ref[...], preferred_element_type=jnp.float32)
              + bout_ref[...])                                 # (T*B, C)
    out_ref[...] = labels.reshape(T, Bblk, C).astype(out_ref.dtype)


def lstm_and_project(anc_tbe, w_ih, w_hh, b_gates, w_out, b_out, *,
                     b_block=None):
    T, B, E = anc_tbe.shape
    Hp4 = w_ih.shape[1]
    Hp = Hp4 // 4
    C = w_out.shape[1]
    if b_block is None:
        b_block = B
    assert B % b_block == 0
    nb = B // b_block
    # TODO(synk): for very long T the (T, b_block, *) blocks/scratches should be
    #             chunked over an extra 'arbitrary' time axis (h/c init under
    #             pl.when) to stay within v7x's 64 MiB VMEM.
    return pl.pallas_call(
        lstm_kernel,
        out_shape=jax.ShapeDtypeStruct((T, B, C), jnp.float32),
        grid_spec=pltpu.PrefetchScalarGridSpec(
            num_scalar_prefetch=0,
            grid=(nb,),                      # batch chunks: independent, parallel
            in_specs=[
                pl.BlockSpec((T, b_block, E), lambda i: (0, i, 0)),
                pl.BlockSpec((E, Hp4), lambda i: (0, 0)),
                pl.BlockSpec((Hp, Hp4), lambda i: (0, 0)),
                pl.BlockSpec((1, Hp4), lambda i: (0, 0)),
                pl.BlockSpec((Hp, C), lambda i: (0, 0)),
                pl.BlockSpec((1, C), lambda i: (0, 0)),
            ],
            out_specs=pl.BlockSpec((T, b_block, C), lambda i: (0, i, 0)),
            scratch_shapes=[
                pltpu.VMEM((T, b_block, Hp4), jnp.float32),  # hoisted x-gates
                pltpu.VMEM((T, b_block, Hp), jnp.float32),   # h_t history
            ],
        ),
        compiler_params=pltpu.CompilerParams(dimension_semantics=("parallel",)),
    )(anc_tbe, w_ih, w_hh, b_gates, w_out, b_out)


# ---------------------------------------------------------------------------
# Wrapper-side padding of H to a multiple of 128 (lane-aligned gate splits).
# Padded hidden units receive zero weights/bias, so:
#   gates_pad = 0 -> i=f=o=0.5, g=0 -> c_pad stays 0, h_pad stays 0,
# and zero rows of W_hh / W_out make them contribute nothing. Exact no-op.
# ---------------------------------------------------------------------------
def _pad_lstm_params(w_ih, w_hh, b_gates, w_out, lane=128):
    E, H4 = w_ih.shape
    H = H4 // 4
    Hp = ((H + lane - 1) // lane) * lane
    if Hp == H:
        return w_ih, w_hh, b_gates, w_out

    def pad_gate_cols(w):
        blocks = jnp.split(w, 4, axis=-1)                      # each (..., H)
        blocks = [jnp.pad(blk, [(0, 0)] * (blk.ndim - 1) + [(0, Hp - H)])
                  for blk in blocks]
        return jnp.concatenate(blocks, axis=-1)                # (..., 4Hp)

    w_ih_p = pad_gate_cols(w_ih)                               # (E, 4Hp)
    w_hh_p = pad_gate_cols(jnp.pad(w_hh, ((0, Hp - H), (0, 0))))  # (Hp, 4Hp)
    b_p = pad_gate_cols(b_gates)                               # (1, 4Hp)
    w_out_p = jnp.pad(w_out, ((0, Hp - H), (0, 0)))            # (Hp, C)
    return w_ih_p, w_hh_p, b_p, w_out_p


# ---------------------------------------------------------------------------
# Full forward pass (glue in plain JAX)
# ---------------------------------------------------------------------------
@functools.partial(jax.jit, static_argnames=("att_dim",))
def lstm_model_forward(x, params, *, att_dim):
    # x: (B, T, E) batch-first, as in PyTorch forward(inputs)
    if att_dim > 0:
        anc = attention(x, params["w1"], params["b1"], params["w2"],
                        params["b2"], params["w3"], params["b3"])
    else:
        anc = x

    w_ih_p, w_hh_p, b_p, w_out_p = _pad_lstm_params(
        params["w_ih"], params["w_hh"], params["b_gates"], params["w_out"])

    anc_tbe = jnp.transpose(anc, (1, 0, 2))                    # (T, B, E)
    labels_tbc = lstm_and_project(anc_tbe, w_ih_p, w_hh_p, b_p, w_out_p,
                                  params["b_out"])             # (T, B, C)
    labels = jnp.transpose(labels_tbc, (1, 0, 2))              # (B, T, C)
    C = labels.shape[-1]
    # TODO(synk): dropout (use_dropout=True, training) not implemented; default
    #             config has use_dropout=False so forward semantics match.
    return labels.reshape(-1, C)                               # == .view(-1, target_size)


# ---------------------------------------------------------------------------
# Pure-JAX reference (for correctness check)
# ---------------------------------------------------------------------------
def reference_forward(x, params, *, att_dim):
    if att_dim > 0:
        a1 = jax.nn.softmax(x @ params["w1"] + params["b1"], axis=2)
        a2 = jax.nn.softmax(x @ params["w2"] + params["b2"], axis=2)
        mat_h = jnp.einsum("bta,bsa->bts", a1, a2)
        xw3 = x @ params["w3"] + params["b3"]
        anc = x + jnp.einsum("bts,bse->bte", mat_h, xw3)
    else:
        anc = x
    B, T, E = anc.shape
    H = params["w_hh"].shape[0]
    h = jnp.zeros((B, H), jnp.float32)
    c = jnp.zeros((B, H), jnp.float32)
    outs = []
    for t in range(T):
        gates = anc[:, t, :] @ params["w_ih"] + h @ params["w_hh"] + params["b_gates"]
        i_g = jax.nn.sigmoid(gates[:, 0 * H:1 * H])
        f_g = jax.nn.sigmoid(gates[:, 1 * H:2 * H])
        g_g = jnp.tanh(gates[:, 2 * H:3 * H])
        o_g = jax.nn.sigmoid(gates[:, 3 * H:4 * H])
        c = f_g * c + i_g * g_g
        h = o_g * jnp.tanh(c)
        outs.append(h @ params["w_out"] + params["b_out"])
    labels = jnp.stack(outs, axis=1)
    return labels.reshape(-1, labels.shape[-1])


# ---------------------------------------------------------------------------
# Deterministic parameter construction + demo
# ---------------------------------------------------------------------------
def make_params(key, *, embedding_dim, hidden_dim, target_size, att_dim):
    E, H, C, A = embedding_dim, hidden_dim, target_size, att_dim
    ks = jax.random.split(key, 12)
    scale = 0.1
    params = {
        # LSTM (stored transposed vs PyTorch: (in, 4H)); b = b_ih + b_hh merged
        "w_ih": scale * jax.random.normal(ks[0], (E, 4 * H), jnp.float32),
        "w_hh": scale * jax.random.normal(ks[1], (H, 4 * H), jnp.float32),
        "b_gates": scale * jax.random.normal(ks[2], (1, 4 * H), jnp.float32),
        # out2label Linear
        "w_out": scale * jax.random.normal(ks[3], (H, C), jnp.float32),
        "b_out": scale * jax.random.normal(ks[4], (1, C), jnp.float32),
    }
    if A > 0:
        params.update({
            "w1": scale * jax.random.normal(ks[5], (E, A), jnp.float32),
            "b1": scale * jax.random.normal(ks[6], (1, A), jnp.float32),
            "w2": scale * jax.random.normal(ks[7], (E, A), jnp.float32),
            "b2": scale * jax.random.normal(ks[8], (1, A), jnp.float32),
            "w3": scale * jax.random.normal(ks[9], (E, E), jnp.float32),
            "b3": scale * jax.random.normal(ks[10], (1, E), jnp.float32),
        })
    return params


if __name__ == "__main__":
    # Small, module-consistent shapes
    B, T = 2, 8                  # batchsize, sequence length
    E, H = 32, 32                # embedding_dim, hidden_dim
    C = 8                        # target_size
    A = 16                       # att_dim > 0 -> attention branch exercised

    key = jax.random.PRNGKey(0)
    k_x, k_p = jax.random.split(key)
    x = jax.random.normal(k_x, (B, T, E), jnp.float32)   # inputs: (B, T, E)
    params = make_params(k_p, embedding_dim=E, hidden_dim=H,
                         target_size=C, att_dim=A)

    out = lstm_model_forward(x, params, att_dim=A)
    out = jax.block_until_ready(out)

    ref = reference_forward(x, params, att_dim=A)
    assert out.shape == (B * T, C), out.shape
    assert jnp.allclose(out, ref, atol=1e-4, rtol=1e-4), (
        float(jnp.max(jnp.abs(out - ref))))

    print("KERNEL_OK")
</pallas_src>

<mosaic_0001>
module attributes {stable_mosaic.version = 11 : i64} {
  func.func @attn_kernel(%arg0: i32, %arg1: memref<2x8x32xf32, #tpu.memory_space<vmem>>, %arg2: memref<32x16xf32, #tpu.memory_space<vmem>>, %arg3: memref<1x16xf32, #tpu.memory_space<vmem>>, %arg4: memref<32x16xf32, #tpu.memory_space<vmem>>, %arg5: memref<1x16xf32, #tpu.memory_space<vmem>>, %arg6: memref<32x32xf32, #tpu.memory_space<vmem>>, %arg7: memref<1x32xf32, #tpu.memory_space<vmem>>, %arg8: memref<2x8x32xf32, #tpu.memory_space<vmem>>) attributes {dimension_semantics = [#tpu.dimension_semantics<arbitrary>], iteration_bounds = array<i64: 1>, scalar_prefetch = 0 : i64, scratch_operands = 0 : i64, tpu.core_type = #tpu.core_type<tc>, window_params = [{pipeline_mode = #tpu.pipeline_mode<synchronous>, transform_indices = @transform_0, window_bounds = array<i64: 2, 8, 32>}, {pipeline_mode = #tpu.pipeline_mode<synchronous>, transform_indices = @transform_1, window_bounds = array<i64: 32, 16>}, {pipeline_mode = #tpu.pipeline_mode<synchronous>, transform_indices = @transform_2, window_bounds = array<i64: 1, 16>}, {pipeline_mode = #tpu.pipeline_mode<synchronous>, transform_indices = @transform_3, window_bounds = array<i64: 32, 16>}, {pipeline_mode = #tpu.pipeline_mode<synchronous>, transform_indices = @transform_4, window_bounds = array<i64: 1, 16>}, {pipeline_mode = #tpu.pipeline_mode<synchronous>, transform_indices = @transform_5, window_bounds = array<i64: 32, 32>}, {pipeline_mode = #tpu.pipeline_mode<synchronous>, transform_indices = @transform_6, window_bounds = array<i64: 1, 32>}, {pipeline_mode = #tpu.pipeline_mode<synchronous>, transform_indices = @transform_7, window_bounds = array<i64: 2, 8, 32>}]} {
    %c0 = arith.constant 0 : index
    %c0_0 = arith.constant 0 : index
    %c0_1 = arith.constant 0 : index
    %0 = vector.load %arg1[%c0, %c0_0, %c0_1] : memref<2x8x32xf32, #tpu.memory_space<vmem>>, vector<2x8x32xf32>
    %1 = vector.shape_cast %0 : vector<2x8x32xf32> to vector<16x32xf32>
    %c0_2 = arith.constant 0 : index
    %c0_3 = arith.constant 0 : index
    %2 = vector.load %arg2[%c0_2, %c0_3] : memref<32x16xf32, #tpu.memory_space<vmem>>, vector<32x16xf32>
    %cst = arith.constant dense<0.000000e+00> : vector<16x16xf32>
    %3 = tpu.matmul %1, %2, %cst {dimension_numbers = #tpu.dot_dimension_numbers<[1], [0], [0], [1], [0, 0, 1, 1], [], []>} : vector<16x32xf32>, vector<32x16xf32>, vector<16x16xf32> -> vector<16x16xf32>
    %c0_4 = arith.constant 0 : index
    %c0_5 = arith.constant 0 : index
    %4 = vector.load %arg3[%c0_4, %c0_5] : memref<1x16xf32, #tpu.memory_space<vmem>>, vector<1x16xf32>
    %5 = vector.broadcast %4 : vector<1x16xf32> to vector<16x16xf32>
    %6 = arith.addf %3, %5 : vector<16x16xf32>
    %cst_6 = arith.constant dense<0xFF800000> : vector<16xf32>
    %7 = vector.multi_reduction <maximumf>, %6, %cst_6 [1] : vector<16x16xf32> to vector<16xf32>
    %8 = vector.shape_cast %7 : vector<16xf32> to vector<16x1xf32>
    %9 = vector.broadcast %8 : vector<16x1xf32> to vector<16x16xf32>
    %10 = arith.subf %6, %9 : vector<16x16xf32>
    %11 = math.exp %10 : vector<16x16xf32>
    %cst_7 = arith.constant dense<0.000000e+00> : vector<16xf32>
    %12 = vector.multi_reduction <add>, %11, %cst_7 [1] : vector<16x16xf32> to vector<16xf32>
    %13 = vector.shape_cast %12 : vector<16xf32> to vector<16x1xf32>
    %14 = tpu.reciprocal %13 : vector<16x1xf32> -> vector<16x1xf32>
    %15 = vector.broadcast %14 : vector<16x1xf32> to vector<16x16xf32>
    %16 = arith.mulf %11, %15 : vector<16x16xf32>
    %17 = vector.shape_cast %16 : vector<16x16xf32> to vector<2x8x16xf32>
    %c0_8 = arith.constant 0 : index
    %c0_9 = arith.constant 0 : index
    %18 = vector.load %arg4[%c0_8, %c0_9] : memref<32x16xf32, #tpu.memory_space<vmem>>, vector<32x16xf32>
    %cst_10 = arith.constant dense<0.000000e+00> : vector<16x16xf32>
    %19 = tpu.matmul %1, %18, %cst_10 {dimension_numbers = #tpu.dot_dimension_numbers<[1], [0], [0], [1], [0, 0, 1, 1], [], []>} : vector<16x32xf32>, vector<32x16xf32>, vector<16x16xf32> -> vector<16x16xf32>
    %c0_11 = arith.constant 0 : index
    %c0_12 = arith.constant 0 : index
    %20 = vector.load %arg5[%c0_11, %c0_12] : memref<1x16xf32, #tpu.memory_space<vmem>>, vector<1x16xf32>
    %21 = vector.broadcast %20 : vector<1x16xf32> to vector<16x16xf32>
    %22 = arith.addf %19, %21 : vector<16x16xf32>
    %cst_13 = arith.constant dense<0xFF800000> : vector<16xf32>
    %23 = vector.multi_reduction <maximumf>, %22, %cst_13 [1] : vector<16x16xf32> to vector<16xf32>
    %24 = vector.shape_cast %23 : vector<16xf32> to vector<16x1xf32>
    %25 = vector.broadcast %24 : vector<16x1xf32> to vector<16x16xf32>
    %26 = arith.subf %22, %25 : vector<16x16xf32>
    %27 = math.exp %26 : vector<16x16xf32>
    %cst_14 = arith.constant dense<0.000000e+00> : vector<16xf32>
    %28 = vector.multi_reduction <add>, %27, %cst_14 [1] : vector<16x16xf32> to vector<16xf32>
    %29 = vector.shape_cast %28 : vector<16xf32> to vector<16x1xf32>
    %30 = tpu.reciprocal %29 : vector<16x1xf32> -> vector<16x1xf32>
    %31 = vector.broadcast %30 : vector<16x1xf32> to vector<16x16xf32>
    %32 = arith.mulf %27, %31 : vector<16x16xf32>
    %33 = vector.shape_cast %32 : vector<16x16xf32> to vector<2x8x16xf32>
    %c0_15 = arith.constant 0 : index
    %c0_16 = arith.constant 0 : index
    %34 = vector.load %arg6[%c0_15, %c0_16] : memref<32x32xf32, #tpu.memory_space<vmem>>, vector<32x32xf32>
    %cst_17 = arith.constant dense<0.000000e+00> : vector<16x32xf32>
    %35 = tpu.matmul %1, %34, %cst_17 {dimension_numbers = #tpu.dot_dimension_numbers<[1], [0], [0], [1], [0, 0, 1, 1], [], []>} : vector<16x32xf32>, vector<32x32xf32>, vector<16x32xf32> -> vector<16x32xf32>
    %c0_18 = arith.constant 0 : index
    %c0_19 = arith.constant 0 : index
    %36 = vector.load %arg7[%c0_18, %c0_19] : memref<1x32xf32, #tpu.memory_space<vmem>>, vector<1x32xf32>
    %37 = vector.broadcast %36 : vector<1x32xf32> to vector<16x32xf32>
    %38 = arith.addf %35, %37 : vector<16x32xf32>
    %39 = vector.shape_cast %38 : vector<16x32xf32> to vector<2x8x32xf32>
    "tpu.trace_start"() <{level = 10 : i32, message = "bta,bsa->bts"}> : () -> ()
    %cst_20 = arith.constant dense<0.000000e+00> : vector<2x8x8xf32>
    %40 = tpu.matmul %17, %33, %cst_20 {dimension_numbers = #tpu.dot_dimension_numbers<[2], [2], [1], [1], [0, 0, 0, 1, 1, 1], [0], [0]>} : vector<2x8x16xf32>, vector<2x8x16xf32>, vector<2x8x8xf32> -> vector<2x8x8xf32>
    "tpu.trace_stop"() : () -> ()
    "tpu.trace_start"() <{level = 10 : i32, message = "bts,bse->bte"}> : () -> ()
    %cst_21 = arith.constant dense<0.000000e+00> : vector<2x8x32xf32>
    %41 = tpu.matmul %40, %39, %cst_21 {dimension_numbers = #tpu.dot_dimension_numbers<[2], [1], [1], [2], [0, 0, 0, 1, 1, 2], [0], [0]>} : vector<2x8x8xf32>, vector<2x8x32xf32>, vector<2x8x32xf32> -> vector<2x8x32xf32>
    "tpu.trace_stop"() : () -> ()
    %42 = arith.addf %0, %41 : vector<2x8x32xf32>
    %c0_22 = arith.constant 0 : index
    %c0_23 = arith.constant 0 : index
    %c0_24 = arith.constant 0 : index
    %43 = vector.load %arg8[%c0_22, %c0_23, %c0_24] : memref<2x8x32xf32, #tpu.memory_space<vmem>>, vector<2x8x32xf32>
    tpu.vector_store %arg8[%c0_22, %c0_23, %c0_24], %42 {strides = array<i32>} : memref<2x8x32xf32, #tpu.memory_space<vmem>>, vector<2x8x32xf32>,
    return
  }
  func.func @transform_0(%arg0: i32) -> (i32, i32, i32) {
    %c0_i32 = arith.constant 0 : i32
    %c0_i32_0 = arith.constant 0 : i32
    %c0_i32_1 = arith.constant 0 : i32
    %c0_i32_2 = arith.constant 0 : i32
    return %c0_i32, %c0_i32_0, %c0_i32_1 : i32, i32, i32
  }
  func.func @transform_1(%arg0: i32) -> (i32, i32) {
    %c0_i32 = arith.constant 0 : i32
    %c0_i32_0 = arith.constant 0 : i32
    %c0_i32_1 = arith.constant 0 : i32
    return %c0_i32, %c0_i32_0 : i32, i32
  }
  func.func @transform_2(%arg0: i32) -> (i32, i32) {
    %c0_i32 = arith.constant 0 : i32
    %c0_i32_0 = arith.constant 0 : i32
    %c0_i32_1 = arith.constant 0 : i32
    return %c0_i32, %c0_i32_0 : i32, i32
  }
  func.func @transform_3(%arg0: i32) -> (i32, i32) {
    %c0_i32 = arith.constant 0 : i32
    %c0_i32_0 = arith.constant 0 : i32
    %c0_i32_1 = arith.constant 0 : i32
    return %c0_i32, %c0_i32_0 : i32, i32
  }
  func.func @transform_4(%arg0: i32) -> (i32, i32) {
    %c0_i32 = arith.constant 0 : i32
    %c0_i32_0 = arith.constant 0 : i32
    %c0_i32_1 = arith.constant 0 : i32
    return %c0_i32, %c0_i32_0 : i32, i32
  }
  func.func @transform_5(%arg0: i32) -> (i32, i32) {
    %c0_i32 = arith.constant 0 : i32
    %c0_i32_0 = arith.constant 0 : i32
    %c0_i32_1 = arith.constant 0 : i32
    return %c0_i32, %c0_i32_0 : i32, i32
  }
  func.func @transform_6(%arg0: i32) -> (i32, i32) {
    %c0_i32 = arith.constant 0 : i32
    %c0_i32_0 = arith.constant 0 : i32
    %c0_i32_1 = arith.constant 0 : i32
    return %c0_i32, %c0_i32_0 : i32, i32
  }
  func.func @transform_7(%arg0: i32) -> (i32, i32, i32) {
    %c0_i32 = arith.constant 0 : i32
    %c0_i32_0 = arith.constant 0 : i32
    %c0_i32_1 = arith.constant 0 : i32
    %c0_i32_2 = arith.constant 0 : i32
    return %c0_i32, %c0_i32_0, %c0_i32_1 : i32, i32, i32
  }
}

module attributes {stable_mosaic.version = 11 : i64} {
  func.func @lstm_kernel(%arg0: i32, %arg1: memref<8x2x32xf32, #tpu.memory_space<vmem>>, %arg2: memref<32x512xf32, #tpu.memory_space<vmem>>, %arg3: memref<128x512xf32, #tpu.memory_space<vmem>>, %arg4: memref<1x512xf32, #tpu.memory_space<vmem>>, %arg5: memref<128x8xf32, #tpu.memory_space<vmem>>, %arg6: memref<1x8xf32, #tpu.memory_space<vmem>>, %arg7: memref<8x2x8xf32, #tpu.memory_space<vmem>>, %arg8: memref<8x2x512xf32, #tpu.memory_space<vmem>>, %arg9: memref<8x2x128xf32, #tpu.memory_space<vmem>>) attributes {dimension_semantics = [#tpu.dimension_semantics<parallel>], iteration_bounds = array<i64: 1>, scalar_prefetch = 0 : i64, scratch_operands = 2 : i64, tpu.core_type = #tpu.core_type<tc>, window_params = [{transform_indices = @transform_0, window_bounds = array<i64: 8, 2, 32>}, {pipeline_mode = #tpu.pipeline_mode<synchronous>, transform_indices = @transform_1, window_bounds = array<i64: 32, 512>}, {pipeline_mode = #tpu.pipeline_mode<synchronous>, transform_indices = @transform_2, window_bounds = array<i64: 128, 512>}, {pipeline_mode = #tpu.pipeline_mode<synchronous>, transform_indices = @transform_3, window_bounds = array<i64: 1, 512>}, {pipeline_mode = #tpu.pipeline_mode<synchronous>, transform_indices = @transform_4, window_bounds = array<i64: 128, 8>}, {pipeline_mode = #tpu.pipeline_mode<synchronous>, transform_indices = @transform_5, window_bounds = array<i64: 1, 8>}, {transform_indices = @transform_6, window_bounds = array<i64: 8, 2, 8>}]} {
    %c0 = arith.constant 0 : index
    %c0_0 = arith.constant 0 : index
    %c0_1 = arith.constant 0 : index
    %0 = vector.load %arg1[%c0, %c0_0, %c0_1] : memref<8x2x32xf32, #tpu.memory_space<vmem>>, vector<8x2x32xf32>
    %1 = vector.shape_cast %0 : vector<8x2x32xf32> to vector<16x32xf32>
    %c0_2 = arith.constant 0 : index
    %c0_3 = arith.constant 0 : index
    %2 = vector.load %arg2[%c0_2, %c0_3] : memref<32x512xf32, #tpu.memory_space<vmem>>, vector<32x512xf32>
    %cst = arith.constant dense<0.000000e+00> : vector<16x512xf32>
    %3 = tpu.matmul %1, %2, %cst {dimension_numbers = #tpu.dot_dimension_numbers<[1], [0], [0], [1], [0, 0, 1, 1], [], []>} : vector<16x32xf32>, vector<32x512xf32>, vector<16x512xf32> -> vector<16x512xf32>
    %c0_4 = arith.constant 0 : index
    %c0_5 = arith.constant 0 : index
    %4 = vector.load %arg4[%c0_4, %c0_5] : memref<1x512xf32, #tpu.memory_space<vmem>>, vector<1x512xf32>
    %5 = vector.broadcast %4 : vector<1x512xf32> to vector<16x512xf32>
    %6 = arith.addf %3, %5 : vector<16x512xf32>
    %7 = vector.shape_cast %6 : vector<16x512xf32> to vector<8x2x512xf32>
    %c0_6 = arith.constant 0 : index
    %c0_7 = arith.constant 0 : index
    %c0_8 = arith.constant 0 : index
    %8 = vector.load %arg8[%c0_6, %c0_7, %c0_8] : memref<8x2x512xf32, #tpu.memory_space<vmem>>, vector<8x2x512xf32>
    tpu.vector_store %arg8[%c0_6, %c0_7, %c0_8], %7 {strides = array<i32>} : memref<8x2x512xf32, #tpu.memory_space<vmem>>, vector<8x2x512xf32>,
    %c0_9 = arith.constant 0 : index
    %c0_10 = arith.constant 0 : index
    %9 = vector.load %arg3[%c0_9, %c0_10] : memref<128x512xf32, #tpu.memory_space<vmem>>, vector<128x512xf32>
    %cst_11 = arith.constant 0.000000e+00 : f32
    %10 = vector.broadcast %cst_11 : f32 to vector<2x128xf32>
    %cst_12 = arith.constant 0.000000e+00 : f32
    %11 = vector.broadcast %cst_12 : f32 to vector<2x128xf32>
    %c0_13 = arith.constant 0 : index
    %c0_14 = arith.constant 0 : index
    %c0_15 = arith.constant 0 : index
    %12 = vector.load %arg8[%c0_13, %c0_14, %c0_15] : memref<8x2x512xf32, #tpu.memory_space<vmem>>, vector<1x2x512xf32>
    %13 = vector.shape_cast %12 : vector<1x2x512xf32> to vector<2x512xf32>
    %cst_16 = arith.constant dense<0.000000e+00> : vector<2x512xf32>
    %14 = tpu.matmul %10, %9, %cst_16 {dimension_numbers = #tpu.dot_dimension_numbers<[1], [0], [0], [1], [0, 0, 1, 1], [], []>} : vector<2x128xf32>, vector<128x512xf32>, vector<2x512xf32> -> vector<2x512xf32>
    %15 = arith.addf %13, %14 : vector<2x512xf32>
    %16 = vector.extract_strided_slice %15 {offsets = [0, 0], sizes = [2, 128], strides = [1, 1]} : vector<2x512xf32> to vector<2x128xf32>
    %17 = arith.negf %16 : vector<2x128xf32>
    %18 = math.exp %17 : vector<2x128xf32>
    %cst_17 = arith.constant 1.000000e+00 : f32
    %19 = vector.broadcast %cst_17 : f32 to vector<2x128xf32>
    %20 = arith.addf %19, %18 : vector<2x128xf32>
    %21 = arith.divf %19, %20 : vector<2x128xf32>
    %22 = vector.extract_strided_slice %15 {offsets = [0, 128], sizes = [2, 128], strides = [1, 1]} : vector<2x512xf32> to vector<2x128xf32>
    %23 = arith.negf %22 : vector<2x128xf32>
    %24 = math.exp %23 : vector<2x128xf32>
    %cst_18 = arith.constant 1.000000e+00 : f32
    %25 = vector.broadcast %cst_18 : f32 to vector<2x128xf32>
    %26 = arith.addf %25, %24 : vector<2x128xf32>
    %27 = arith.divf %25, %26 : vector<2x128xf32>
    %28 = vector.extract_strided_slice %15 {offsets = [0, 256], sizes = [2, 128], strides = [1, 1]} : vector<2x512xf32> to vector<2x128xf32>
    %29 = math.tanh %28 : vector<2x128xf32>
    %30 = vector.extract_strided_slice %15 {offsets = [0, 384], sizes = [2, 128], strides = [1, 1]} : vector<2x512xf32> to vector<2x128xf32>
    %31 = arith.negf %30 : vector<2x128xf32>
    %32 = math.exp %31 : vector<2x128xf32>
    %cst_19 = arith.constant 1.000000e+00 : f32
    %33 = vector.broadcast %cst_19 : f32 to vector<2x128xf32>
    %34 = arith.addf %33, %32 : vector<2x128xf32>
    %35 = arith.divf %33, %34 : vector<2x128xf32>
    %36 = arith.mulf %27, %11 : vector<2x128xf32>
    %37 = arith.mulf %21, %29 : vector<2x128xf32>
    %38 = arith.addf %36, %37 : vector<2x128xf32>
    %39 = math.tanh %38 : vector<2x128xf32>
    %40 = arith.mulf %35, %39 : vector<2x128xf32>
    %c0_20 = arith.constant 0 : index
    %c0_21 = arith.constant 0 : index
    %c0_22 = arith.constant 0 : index
    %41 = vector.load %arg9[%c0_20, %c0_21, %c0_22] : memref<8x2x128xf32, #tpu.memory_space<vmem>>, vector<1x2x128xf32>
    %42 = vector.shape_cast %41 : vector<1x2x128xf32> to vector<2x128xf32>
    %43 = vector.shape_cast %40 : vector<2x128xf32> to vector<1x2x128xf32>
    tpu.vector_store %arg9[%c0_20, %c0_21, %c0_22], %43 {strides = array<i32>} : memref<8x2x128xf32, #tpu.memory_space<vmem>>, vector<1x2x128xf32>,
    %c1 = arith.constant 1 : index
    %c0_23 = arith.constant 0 : index
    %c0_24 = arith.constant 0 : index
    %44 = vector.load %arg8[%c1, %c0_23, %c0_24] : memref<8x2x512xf32, #tpu.memory_space<vmem>>, vector<1x2x512xf32>
    %45 = vector.shape_cast %44 : vector<1x2x512xf32> to vector<2x512xf32>
    %cst_25 = arith.constant dense<0.000000e+00> : vector<2x512xf32>
    %46 = tpu.matmul %40, %9, %cst_25 {dimension_numbers = #tpu.dot_dimension_numbers<[1], [0], [0], [1], [0, 0, 1, 1], [], []>} : vector<2x128xf32>, vector<128x512xf32>, vector<2x512xf32> -> vector<2x512xf32>
    %47 = arith.addf %45, %46 : vector<2x512xf32>
    %48 = vector.extract_strided_slice %47 {offsets = [0, 0], sizes = [2, 128], strides = [1, 1]} : vector<2x512xf32> to vector<2x128xf32>
    %49 = arith.negf %48 : vector<2x128xf32>
    %50 = math.exp %49 : vector<2x128xf32>
    %cst_26 = arith.constant 1.000000e+00 : f32
    %51 = vector.broadcast %cst_26 : f32 to vector<2x128xf32>
    %52 = arith.addf %51, %50 : vector<2x128xf32>
    %53 = arith.divf %51, %52 : vector<2x128xf32>
    %54 = vector.extract_strided_slice %47 {offsets = [0, 128], sizes = [2, 128], strides = [1, 1]} : vector<2x512xf32> to vector<2x128xf32>
    %55 = arith.negf %54 : vector<2x128xf32>
    %56 = math.exp %55 : vector<2x128xf32>
    %cst_27 = arith.constant 1.000000e+00 : f32
    %57 = vector.broadcast %cst_27 : f32 to vector<2x128xf32>
    %58 = arith.addf %57, %56 : vector<2x128xf32>
    %59 = arith.divf %57, %58 : vector<2x128xf32>
    %60 = vector.extract_strided_slice %47 {offsets = [0, 256], sizes = [2, 128], strides = [1, 1]} : vector<2x512xf32> to vector<2x128xf32>
    %61 = math.tanh %60 : vector<2x128xf32>
    %62 = vector.extract_strided_slice %47 {offsets = [0, 384], sizes = [2, 128], strides = [1, 1]} : vector<2x512xf32> to vector<2x128xf32>
    %63 = arith.negf %62 : vector<2x128xf32>
    %64 = math.exp %63 : vector<2x128xf32>
    %cst_28 = arith.constant 1.000000e+00 : f32
    %65 = vector.broadcast %cst_28 : f32 to vector<2x128xf32>
    %66 = arith.addf %65, %64 : vector<2x128xf32>
    %67 = arith.divf %65, %66 : vector<2x128xf32>
    %68 = arith.mulf %59, %38 : vector<2x128xf32>
    %69 = arith.mulf %53, %61 : vector<2x128xf32>
    %70 = arith.addf %68, %69 : vector<2x128xf32>
    %71 = math.tanh %70 : vector<2x128xf32>
    %72 = arith.mulf %67, %71 : vector<2x128xf32>
    %c1_29 = arith.constant 1 : index
    %c0_30 = arith.constant 0 : index
    %c0_31 = arith.constant 0 : index
    %73 = vector.load %arg9[%c1_29, %c0_30, %c0_31] : memref<8x2x128xf32, #tpu.memory_space<vmem>>, vector<1x2x128xf32>
    %74 = vector.shape_cast %73 : vector<1x2x128xf32> to vector<2x128xf32>
    %75 = vector.shape_cast %72 : vector<2x128xf32> to vector<1x2x128xf32>
    tpu.vector_store %arg9[%c1_29, %c0_30, %c0_31], %75 {strides = array<i32>} : memref<8x2x128xf32, #tpu.memory_space<vmem>>, vector<1x2x128xf32>,
    %c2 = arith.constant 2 : index
    %c0_32 = arith.constant 0 : index
    %c0_33 = arith.constant 0 : index
    %76 = vector.load %arg8[%c2, %c0_32, %c0_33] : memref<8x2x512xf32, #tpu.memory_space<vmem>>, vector<1x2x512xf32>
    %77 = vector.shape_cast %76 : vector<1x2x512xf32> to vector<2x512xf32>
    %cst_34 = arith.constant dense<0.000000e+00> : vector<2x512xf32>
    %78 = tpu.matmul %72, %9, %cst_34 {dimension_numbers = #tpu.dot_dimension_numbers<[1], [0], [0], [1], [0, 0, 1, 1], [], []>} : vector<2x128xf32>, vector<128x512xf32>, vector<2x512xf32> -> vector<2x512xf32>
    %79 = arith.addf %77, %78 : vector<2x512xf32>
    %80 = vector.extract_strided_slice %79 {offsets = [0, 0], sizes = [2, 128], strides = [1, 1]} : vector<2x512xf32> to vector<2x128xf32>
    %81 = arith.negf %80 : vector<2x128xf32>
    %82 = math.exp %81 : vector<2x128xf32>
    %cst_35 = arith.constant 1.000000e+00 : f32
    %83 = vector.broadcast %cst_35 : f32 to vector<2x128xf32>
    %84 = arith.addf %83, %82 : vector<2x128xf32>
    %85 = arith.divf %83, %84 : vector<2x128xf32>
    %86 = vector.extract_strided_slice %79 {offsets = [0, 128], sizes = [2, 128], strides = [1, 1]} : vector<2x512xf32> to vector<2x128xf32>
    %87 = arith.negf %86 : vector<2x128xf32>
    %88 = math.exp %87 : vector<2x128xf32>
    %cst_36 = arith.constant 1.000000e+00 : f32
    %89 = vector.broadcast %cst_36 : f32 to vector<2x128xf32>
    %90 = arith.addf %89, %88 : vector<2x128xf32>
    %91 = arith.divf %89, %90 : vector<2x128xf32>
    %92 = vector.extract_strided_slice %79 {offsets = [0, 256], sizes = [2, 128], strides = [1, 1]} : vector<2x512xf32> to vector<2x128xf32>
    %93 = math.tanh %92 : vector<2x128xf32>
    %94 = vector.extract_strided_slice %79 {offsets = [0, 384], sizes = [2, 128], strides = [1, 1]} : vector<2x512xf32> to vector<2x128xf32>
    %95 = arith.negf %94 : vector<2x128xf32>
    %96 = math.exp %95 : vector<2x128xf32>
    %cst_37 = arith.constant 1.000000e+00 : f32
    %97 = vector.broadcast %cst_37 : f32 to vector<2x128xf32>
    %98 = arith.addf %97, %96 : vector<2x128xf32>
    %99 = arith.divf %97, %98 : vector<2x128xf32>
    %100 = arith.mulf %91, %70 : vector<2x128xf32>
    %101 = arith.mulf %85, %93 : vector<2x128xf32>
    %102 = arith.addf %100, %101 : vector<2x128xf32>
    %103 = math.tanh %102 : vector<2x128xf32>
    %104 = arith.mulf %99, %103 : vector<2x128xf32>
    %c2_38 = arith.constant 2 : index
    %c0_39 = arith.constant 0 : index
    %c0_40 = arith.constant 0 : index
    %105 = vector.load %arg9[%c2_38, %c0_39, %c0_40] : memref<8x2x128xf32, #tpu.memory_space<vmem>>, vector<1x2x128xf32>
    %106 = vector.shape_cast %105 : vector<1x2x128xf32> to vector<2x128xf32>
    %107 = vector.shape_cast %104 : vector<2x128xf32> to vector<1x2x128xf32>
    tpu.vector_store %arg9[%c2_38, %c0_39, %c0_40], %107 {strides = array<i32>} : memref<8x2x128xf32, #tpu.memory_space<vmem>>, vector<1x2x128xf32>,
    %c3 = arith.constant 3 : index
    %c0_41 = arith.constant 0 : index
    %c0_42 = arith.constant 0 : index
    %108 = vector.load %arg8[%c3, %c0_41, %c0_42] : memref<8x2x512xf32, #tpu.memory_space<vmem>>, vector<1x2x512xf32>
    %109 = vector.shape_cast %108 : vector<1x2x512xf32> to vector<2x512xf32>
    %cst_43 = arith.constant dense<0.000000e+00> : vector<2x512xf32>
    %110 = tpu.matmul %104, %9, %cst_43 {dimension_numbers = #tpu.dot_dimension_numbers<[1], [0], [0], [1], [0, 0, 1, 1], [], []>} : vector<2x128xf32>, vector<128x512xf32>, vector<2x512xf32> -> vector<2x512xf32>
    %111 = arith.addf %109, %110 : vector<2x512xf32>
    %112 = vector.extract_strided_slice %111 {offsets = [0, 0], sizes = [2, 128], strides = [1, 1]} : vector<2x512xf32> to vector<2x128xf32>
    %113 = arith.negf %112 : vector<2x128xf32>
    %114 = math.exp %113 : vector<2x128xf32>
    %cst_44 = arith.constant 1.000000e+00 : f32
    %115 = vector.broadcast %cst_44 : f32 to vector<2x128xf32>
    %116 = arith.addf %115, %114 : vector<2x128xf32>
    %117 = arith.divf %115, %116 : vector<2x128xf32>
    %118 = vector.extract_strided_slice %111 {offsets = [0, 128], sizes = [2, 128], strides = [1, 1]} : vector<2x512xf32> to vector<2x128xf32>
    %119 = arith.negf %118 : vector<2x128xf32>
    %120 = math.exp %119 : vector<2x128xf32>
    %cst_45 = arith.constant 1.000000e+00 : f32
    %121 = vector.broadcast %cst_45 : f32 to vector<2x128xf32>
    %122 = arith.addf %121, %120 : vector<2x128xf32>
    %123 = arith.divf %121, %122 : vector<2x128xf32>
    %124 = vector.extract_strided_slice %111 {offsets = [0, 256], sizes = [2, 128], strides = [1, 1]} : vector<2x512xf32> to vector<2x128xf32>
    %125 = math.tanh %124 : vector<2x128xf32>
    %126 = vector.extract_strided_slice %111 {offsets = [0, 384], sizes = [2, 128], strides = [1, 1]} : vector<2x512xf32> to vector<2x128xf32>
    %127 = arith.negf %126 : vector<2x128xf32>
    %128 = math.exp %127 : vector<2x128xf32>
    %cst_46 = arith.constant 1.000000e+00 : f32
    %129 = vector.broadcast %cst_46 : f32 to vector<2x128xf32>
    %130 = arith.addf %129, %128 : vector<2x128xf32>
    %131 = arith.divf %129, %130 : vector<2x128xf32>
    %132 = arith.mulf %123, %102 : vector<2x128xf32>
    %133 = arith.mulf %117, %125 : vector<2x128xf32>
    %134 = arith.addf %132, %133 : vector<2x128xf32>
    %135 = math.tanh %134 : vector<2x128xf32>
    %136 = arith.mulf %131, %135 : vector<2x128xf32>
    %c3_47 = arith.constant 3 : index
    %c0_48 = arith.constant 0 : index
    %c0_49 = arith.constant 0 : index
    %137 = vector.load %arg9[%c3_47, %c0_48, %c0_49] : memref<8x2x128xf32, #tpu.memory_space<vmem>>, vector<1x2x128xf32>
    %138 = vector.shape_cast %137 : vector<1x2x128xf32> to vector<2x128xf32>
    %139 = vector.shape_cast %136 : vector<2x128xf32> to vector<1x2x128xf32>
    tpu.vector_store %arg9[%c3_47, %c0_48, %c0_49], %139 {strides = array<i32>} : memref<8x2x128xf32, #tpu.memory_space<vmem>>, vector<1x2x128xf32>,
    %c4 = arith.constant 4 : index
    %c0_50 = arith.constant 0 : index
    %c0_51 = arith.constant 0 : index
    %140 = vector.load %arg8[%c4, %c0_50, %c0_51] : memref<8x2x512xf32, #tpu.memory_space<vmem>>, vector<1x2x512xf32>
    %141 = vector.shape_cast %140 : vector<1x2x512xf32> to vector<2x512xf32>
    %cst_52 = arith.constant dense<0.000000e+00> : vector<2x512xf32>
    %142 = tpu.matmul %136, %9, %cst_52 {dimension_numbers = #tpu.dot_dimension_numbers<[1], [0], [0], [1], [0, 0, 1, 1], [], []>} : vector<2x128xf32>, vector<128x512xf32>, vector<2x512xf32> -> vector<2x512xf32>
    %143 = arith.addf %141, %142 : vector<2x512xf32>
    %144 = vector.extract_strided_slice %143 {offsets = [0, 0], sizes = [2, 128], strides = [1, 1]} : vector<2x512xf32> to vector<2x128xf32>
    %145 = arith.negf %144 : vector<2x128xf32>
    %146 = math.exp %145 : vector<2x128xf32>
    %cst_53 = arith.constant 1.000000e+00 : f32
    %147 = vector.broadcast %cst_53 : f32 to vector<2x128xf32>
    %148 = arith.addf %147, %146 : vector<2x128xf32>
    %149 = arith.divf %147, %148 : vector<2x128xf32>
    %150 = vector.extract_strided_slice %143 {offsets = [0, 128], sizes = [2, 128], strides = [1, 1]} : vector<2x512xf32> to vector<2x128xf32>
    %151 = arith.negf %150 : vector<2x128xf32>
    %152 = math.exp %151 : vector<2x128xf32>
    %cst_54 = arith.constant 1.000000e+00 : f32
    %153 = vector.broadcast %cst_54 : f32 to vector<2x128xf32>
    %154 = arith.addf %153, %152 : vector<2x128xf32>
    %155 = arith.divf %153, %154 : vector<2x128xf32>
    %156 = vector.extract_strided_slice %143 {offsets = [0, 256], sizes = [2, 128], strides = [1, 1]} : vector<2x512xf32> to vector<2x128xf32>
    %157 = math.tanh %156 : vector<2x128xf32>
    %158 = vector.extract_strided_slice %143 {offsets = [0, 384], sizes = [2, 128], strides = [1, 1]} : vector<2x512xf32> to vector<2x128xf32>
    %159 = arith.negf %158 : vector<2x128xf32>
    %160 = math.exp %159 : vector<2x128xf32>
    %cst_55 = arith.constant 1.000000e+00 : f32
    %161 = vector.broadcast %cst_55 : f32 to vector<2x128xf32>
    %162 = arith.addf %161, %160 : vector<2x128xf32>
    %163 = arith.divf %161, %162 : vector<2x128xf32>
    %164 = arith.mulf %155, %134 : vector<2x128xf32>
    %165 = arith.mulf %149, %157 : vector<2x128xf32>
    %166 = arith.addf %164, %165 : vector<2x128xf32>
    %167 = math.tanh %166 : vector<2x128xf32>
    %168 = arith.mulf %163, %167 : vector<2x128xf32>
    %c4_56 = arith.constant 4 : index
    %c0_57 = arith.constant 0 : index
    %c0_58 = arith.constant 0 : index
    %169 = vector.load %arg9[%c4_56, %c0_57, %c0_58] : memref<8x2x128xf32, #tpu.memory_space<vmem>>, vector<1x2x128xf32>
    %170 = vector.shape_cast %169 : vector<1x2x128xf32> to vector<2x128xf32>
    %171 = vector.shape_cast %168 : vector<2x128xf32> to vector<1x2x128xf32>
    tpu.vector_store %arg9[%c4_56, %c0_57, %c0_58], %171 {strides = array<i32>} : memref<8x2x128xf32, #tpu.memory_space<vmem>>, vector<1x2x128xf32>,
    %c5 = arith.constant 5 : index
    %c0_59 = arith.constant 0 : index
    %c0_60 = arith.constant 0 : index
    %172 = vector.load %arg8[%c5, %c0_59, %c0_60] : memref<8x2x512xf32, #tpu.memory_space<vmem>>, vector<1x2x512xf32>
    %173 = vector.shape_cast %172 : vector<1x2x512xf32> to vector<2x512xf32>
    %cst_61 = arith.constant dense<0.000000e+00> : vector<2x512xf32>
    %174 = tpu.matmul %168, %9, %cst_61 {dimension_numbers = #tpu.dot_dimension_numbers<[1], [0], [0], [1], [0, 0, 1, 1], [], []>} : vector<2x128xf32>, vector<128x512xf32>, vector<2x512xf32> -> vector<2x512xf32>
    %175 = arith.addf %173, %174 : vector<2x512xf32>
    %176 = vector.extract_strided_slice %175 {offsets = [0, 0], sizes = [2, 128], strides = [1, 1]} : vector<2x512xf32> to vector<2x128xf32>
    %177 = arith.negf %176 : vector<2x128xf32>
    %178 = math.exp %177 : vector<2x128xf32>
    %cst_62 = arith.constant 1.000000e+00 : f32
    %179 = vector.broadcast %cst_62 : f32 to vector<2x128xf32>
    %180 = arith.addf %179, %178 : vector<2x128xf32>
    %181 = arith.divf %179, %180 : vector<2x128xf32>
    %182 = vector.extract_strided_slice %175 {offsets = [0, 128], sizes = [2, 128], strides = [1, 1]} : vector<2x512xf32> to vector<2x128xf32>
    %183 = arith.negf %182 : vector<2x128xf32>
    %184 = math.exp %183 : vector<2x128xf32>
    %cst_63 = arith.constant 1.000000e+00 : f32
    %185 = vector.broadcast %cst_63 : f32 to vector<2x128xf32>
    %186 = arith.addf %185, %184 : vector<2x128xf32>
    %187 = arith.divf %185, %186 : vector<2x128xf32>
    %188 = vector.extract_strided_slice %175 {offsets = [0, 256], sizes = [2, 128], strides = [1, 1]} : vector<2x512xf32> to vector<2x128xf32>
    %189 = math.tanh %188 : vector<2x128xf32>
    %190 = vector.extract_strided_slice %175 {offsets = [0, 384], sizes = [2, 128], strides = [1, 1]} : vector<2x512xf32> to vector<2x128xf32>
    %191 = arith.negf %190 : vector<2x128xf32>
    %192 = math.exp %191 : vector<2x128xf32>
    %cst_64 = arith.constant 1.000000e+00 : f32
    %193 = vector.broadcast %cst_64 : f32 to vector<2x128xf32>
    %194 = arith.addf %193, %192 : vector<2x128xf32>
    %195 = arith.divf %193, %194 : vector<2x128xf32>
    %196 = arith.mulf %187, %166 : vector<2x128xf32>
    %197 = arith.mulf %181, %189 : vector<2x128xf32>
    %198 = arith.addf %196, %197 : vector<2x128xf32>
    %199 = math.tanh %198 : vector<2x128xf32>
    %200 = arith.mulf %195, %199 : vector<2x128xf32>
    %c5_65 = arith.constant 5 : index
    %c0_66 = arith.constant 0 : index
    %c0_67 = arith.constant 0 : index
    %201 = vector.load %arg9[%c5_65, %c0_66, %c0_67] : memref<8x2x128xf32, #tpu.memory_space<vmem>>, vector<1x2x128xf32>
    %202 = vector.shape_cast %201 : vector<1x2x128xf32> to vector<2x128xf32>
    %203 = vector.shape_cast %200 : vector<2x128xf32> to vector<1x2x128xf32>
    tpu.vector_store %arg9[%c5_65, %c0_66, %c0_67], %203 {strides = array<i32>} : memref<8x2x128xf32, #tpu.memory_space<vmem>>, vector<1x2x128xf32>,
    %c6 = arith.constant 6 : index
    %c0_68 = arith.constant 0 : index
    %c0_69 = arith.constant 0 : index
    %204 = vector.load %arg8[%c6, %c0_68, %c0_69] : memref<8x2x512xf32, #tpu.memory_space<vmem>>, vector<1x2x512xf32>
    %205 = vector.shape_cast %204 : vector<1x2x512xf32> to vector<2x512xf32>
    %cst_70 = arith.constant dense<0.000000e+00> : vector<2x512xf32>
    %206 = tpu.matmul %200, %9, %cst_70 {dimension_numbers = #tpu.dot_dimension_numbers<[1], [0], [0], [1], [0, 0, 1, 1], [], []>} : vector<2x128xf32>, vector<128x512xf32>, vector<2x512xf32> -> vector<2x512xf32>
    %207 = arith.addf %205, %206 : vector<2x512xf32>
    %208 = vector.extract_strided_slice %207 {offsets = [0, 0], sizes = [2, 128], strides = [1, 1]} : vector<2x512xf32> to vector<2x128xf32>
    %209 = arith.negf %208 : vector<2x128xf32>
    %210 = math.exp %209 : vector<2x128xf32>
    %cst_71 = arith.constant 1.000000e+00 : f32
    %211 = vector.broadcast %cst_71 : f32 to vector<2x128xf32>
    %212 = arith.addf %211, %210 : vector<2x128xf32>
    %213 = arith.divf %211, %212 : vector<2x128xf32>
    %214 = vector.extract_strided_slice %207 {offsets = [0, 128], sizes = [2, 128], strides = [1, 1]} : vector<2x512xf32> to vector<2x128xf32>
    %215 = arith.negf %214 : vector<2x128xf32>
    %216 = math.exp %215 : vector<2x128xf32>
    %cst_72 = arith.constant 1.000000e+00 : f32
    %217 = vector.broadcast %cst_72 : f32 to vector<2x128xf32>
    %218 = arith.addf %217, %216 : vector<2x128xf32>
    %219 = arith.divf %217, %218 : vector<2x128xf32>
    %220 = vector.extract_strided_slice %207 {offsets = [0, 256], sizes = [2, 128], strides = [1, 1]} : vector<2x512xf32> to vector<2x128xf32>
    %221 = math.tanh %220 : vector<2x128xf32>
    %222 = vector.extract_strided_slice %207 {offsets = [0, 384], sizes = [2, 128], strides = [1, 1]} : vector<2x512xf32> to vector<2x128xf32>
    %223 = arith.negf %222 : vector<2x128xf32>
    %224 = math.exp %223 : vector<2x128xf32>
    %cst_73 = arith.constant 1.000000e+00 : f32
    %225 = vector.broadcast %cst_73 : f32 to vector<2x128xf32>
    %226 = arith.addf %225, %224 : vector<2x128xf32>
    %227 = arith.divf %225, %226 : vector<2x128xf32>
    %228 = arith.mulf %219, %198 : vector<2x128xf32>
    %229 = arith.mulf %213, %221 : vector<2x128xf32>
    %230 = arith.addf %228, %229 : vector<2x128xf32>
    %231 = math.tanh %230 : vector<2x128xf32>
    %232 = arith.mulf %227, %231 : vector<2x128xf32>
    %c6_74 = arith.constant 6 : index
    %c0_75 = arith.constant 0 : index
    %c0_76 = arith.constant 0 : index
    %233 = vector.load %arg9[%c6_74, %c0_75, %c0_76] : memref<8x2x128xf32, #tpu.memory_space<vmem>>, vector<1x2x128xf32>
    %234 = vector.shape_cast %233 : vector<1x2x128xf32> to vector<2x128xf32>
    %235 = vector.shape_cast %232 : vector<2x128xf32> to vector<1x2x128xf32>
    tpu.vector_store %arg9[%c6_74, %c0_75, %c0_76], %235 {strides = array<i32>} : memref<8x2x128xf32, #tpu.memory_space<vmem>>, vector<1x2x128xf32>,
    %c7 = arith.constant 7 : index
    %c0_77 = arith.constant 0 : index
    %c0_78 = arith.constant 0 : index
    %236 = vector.load %arg8[%c7, %c0_77, %c0_78] : memref<8x2x512xf32, #tpu.memory_space<vmem>>, vector<1x2x512xf32>
    %237 = vector.shape_cast %236 : vector<1x2x512xf32> to vector<2x512xf32>
    %cst_79 = arith.constant dense<0.000000e+00> : vector<2x512xf32>
    %238 = tpu.matmul %232, %9, %cst_79 {dimension_numbers = #tpu.dot_dimension_numbers<[1], [0], [0], [1], [0, 0, 1, 1], [], []>} : vector<2x128xf32>, vector<128x512xf32>, vector<2x512xf32> -> vector<2x512xf32>
    %239 = arith.addf %237, %238 : vector<2x512xf32>
    %240 = vector.extract_strided_slice %239 {offsets = [0, 0], sizes = [2, 128], strides = [1, 1]} : vector<2x512xf32> to vector<2x128xf32>
    %241 = arith.negf %240 : vector<2x128xf32>
    %242 = math.exp %241 : vector<2x128xf32>
    %cst_80 = arith.constant 1.000000e+00 : f32
    %243 = vector.broadcast %cst_80 : f32 to vector<2x128xf32>
    %244 = arith.addf %243, %242 : vector<2x128xf32>
    %245 = arith.divf %243, %244 : vector<2x128xf32>
    %246 = vector.extract_strided_slice %239 {offsets = [0, 128], sizes = [2, 128], strides = [1, 1]} : vector<2x512xf32> to vector<2x128xf32>
    %247 = arith.negf %246 : vector<2x128xf32>
    %248 = math.exp %247 : vector<2x128xf32>
    %cst_81 = arith.constant 1.000000e+00 : f32
    %249 = vector.broadcast %cst_81 : f32 to vector<2x128xf32>
    %250 = arith.addf %249, %248 : vector<2x128xf32>
    %251 = arith.divf %249, %250 : vector<2x128xf32>
    %252 = vector.extract_strided_slice %239 {offsets = [0, 256], sizes = [2, 128], strides = [1, 1]} : vector<2x512xf32> to vector<2x128xf32>
    %253 = math.tanh %252 : vector<2x128xf32>
    %254 = vector.extract_strided_slice %239 {offsets = [0, 384], sizes = [2, 128], strides = [1, 1]} : vector<2x512xf32> to vector<2x128xf32>
    %255 = arith.negf %254 : vector<2x128xf32>
    %256 = math.exp %255 : vector<2x128xf32>
    %cst_82 = arith.constant 1.000000e+00 : f32
    %257 = vector.broadcast %cst_82 : f32 to vector<2x128xf32>
    %258 = arith.addf %257, %256 : vector<2x128xf32>
    %259 = arith.divf %257, %258 : vector<2x128xf32>
    %260 = arith.mulf %251, %230 : vector<2x128xf32>
    %261 = arith.mulf %245, %253 : vector<2x128xf32>
    %262 = arith.addf %260, %261 : vector<2x128xf32>
    %263 = math.tanh %262 : vector<2x128xf32>
    %264 = arith.mulf %259, %263 : vector<2x128xf32>
    %c7_83 = arith.constant 7 : index
    %c0_84 = arith.constant 0 : index
    %c0_85 = arith.constant 0 : index
    %265 = vector.load %arg9[%c7_83, %c0_84, %c0_85] : memref<8x2x128xf32, #tpu.memory_space<vmem>>, vector<1x2x128xf32>
    %266 = vector.shape_cast %265 : vector<1x2x128xf32> to vector<2x128xf32>
    %267 = vector.shape_cast %264 : vector<2x128xf32> to vector<1x2x128xf32>
    tpu.vector_store %arg9[%c7_83, %c0_84, %c0_85], %267 {strides = array<i32>} : memref<8x2x128xf32, #tpu.memory_space<vmem>>, vector<1x2x128xf32>,
    %c0_86 = arith.constant 0 : index
    %c0_87 = arith.constant 0 : index
    %c0_88 = arith.constant 0 : index
    %268 = vector.load %arg9[%c0_86, %c0_87, %c0_88] : memref<8x2x128xf32, #tpu.memory_space<vmem>>, vector<8x2x128xf32>
    %269 = vector.shape_cast %268 : vector<8x2x128xf32> to vector<16x128xf32>
    %c0_89 = arith.constant 0 : index
    %c0_90 = arith.constant 0 : index
    %270 = vector.load %arg5[%c0_89, %c0_90] : memref<128x8xf32, #tpu.memory_space<vmem>>, vector<128x8xf32>
    %cst_91 = arith.constant dense<0.000000e+00> : vector<16x8xf32>
    %271 = tpu.matmul %269, %270, %cst_91 {dimension_numbers = #tpu.dot_dimension_numbers<[1], [0], [0], [1], [0, 0, 1, 1], [], []>} : vector<16x128xf32>, vector<128x8xf32>, vector<16x8xf32> -> vector<16x8xf32>
    %c0_92 = arith.constant 0 : index
    %c0_93 = arith.constant 0 : index
    %272 = vector.load %arg6[%c0_92, %c0_93] : memref<1x8xf32, #tpu.memory_space<vmem>>, vector<1x8xf32>
    %273 = vector.broadcast %272 : vector<1x8xf32> to vector<16x8xf32>
    %274 = arith.addf %271, %273 : vector<16x8xf32>
    %275 = vector.shape_cast %274 : vector<16x8xf32> to vector<8x2x8xf32>
    %c0_94 = arith.constant 0 : index
    %c0_95 = arith.constant 0 : index
    %c0_96 = arith.constant 0 : index
    %276 = vector.load %arg7[%c0_94, %c0_95, %c0_96] : memref<8x2x8xf32, #tpu.memory_space<vmem>>, vector<8x2x8xf32>
    tpu.vector_store %arg7[%c0_94, %c0_95, %c0_96], %275 {strides = array<i32>} : memref<8x2x8xf32, #tpu.memory_space<vmem>>, vector<8x2x8xf32>,
    return
  }
  func.func @transform_0(%arg0: i32) -> (i32, i32, i32) {
    %c0_i32 = arith.constant 0 : i32
    %c0_i32_0 = arith.constant 0 : i32
    %c0_i32_1 = arith.constant 0 : i32
    return %c0_i32, %arg0, %c0_i32_0 : i32, i32, i32
  }
  func.func @transform_1(%arg0: i32) -> (i32, i32) {
    %c0_i32 = arith.constant 0 : i32
    %c0_i32_0 = arith.constant 0 : i32
    %c0_i32_1 = arith.constant 0 : i32
    return %c0_i32, %c0_i32_0 : i32, i32
  }
  func.func @transform_2(%arg0: i32) -> (i32, i32) {
    %c0_i32 = arith.constant 0 : i32
    %c0_i32_0 = arith.constant 0 : i32
    %c0_i32_1 = arith.constant 0 : i32
    return %c0_i32, %c0_i32_0 : i32, i32
  }
  func.func @transform_3(%arg0: i32) -> (i32, i32) {
    %c0_i32 = arith.constant 0 : i32
    %c0_i32_0 = arith.constant 0 : i32
    %c0_i32_1 = arith.constant 0 : i32
    return %c0_i32, %c0_i32_0 : i32, i32
  }
  func.func @transform_4(%arg0: i32) -> (i32, i32) {
    %c0_i32 = arith.constant 0 : i32
    %c0_i32_0 = arith.constant 0 : i32
    %c0_i32_1 = arith.constant 0 : i32
    return %c0_i32, %c0_i32_0 : i32, i32
  }
  func.func @transform_5(%arg0: i32) -> (i32, i32) {
    %c0_i32 = arith.constant 0 : i32
    %c0_i32_0 = arith.constant 0 : i32
    %c0_i32_1 = arith.constant 0 : i32
    return %c0_i32, %c0_i32_0 : i32, i32
  }
  func.func @transform_6(%arg0: i32) -> (i32, i32, i32) {
    %c0_i32 = arith.constant 0 : i32
    %c0_i32_0 = arith.constant 0 : i32
    %c0_i32_1 = arith.constant 0 : i32
    return %c0_i32, %arg0, %c0_i32_0 : i32, i32, i32
  }
}

</mosaic_0001>

<llo_original>
// kernel: lstm_model_forward.2
$region0: #{lstm_model_forward.2}
  #allocation0 [shape = 'u32[]', space=smem, size = 0x4, offset = 0x4, fixed_abs, tag = 'smem constant byte address 0x4 - core index']
  #allocation1 [shape = 'u32[72,128]{1,0:T(1,128)}', space=vmem, size = 0x9000, scoped, tag = 'internal scratch']
  %s0 = inlined_call_operand.vmem [shape: f32[2,8,32], index: 0, kind: input, shape index: {}]
  %s1 = inlined_call_operand.vmem [shape: f32[32,16], index: 1, kind: input, shape index: {}]
  %s2 = inlined_call_operand.vmem [shape: f32[1,16], index: 2, kind: input, shape index: {}]
  %s3 = inlined_call_operand.vmem [shape: f32[32,16], index: 3, kind: input, shape index: {}]
  %s4 = inlined_call_operand.vmem [shape: f32[1,16], index: 4, kind: input, shape index: {}]
  %s5 = inlined_call_operand.vmem [shape: f32[32,32], index: 5, kind: input, shape index: {}]
  %s6 = inlined_call_operand.vmem [shape: f32[1,32], index: 6, kind: input, shape index: {}]
  %s7 = inlined_call_operand.vmem [shape: f32[2,8,32], index: 7, kind: output, shape index: {}]
  %s8 = sld [smem:[#allocation0]]
  $region38: #{lstm_model_forward.2} parent=0
    _
  %s10 = ssub.s32 1, %s8
  %s11 = scalar_select 0, %s10, %s8
  // Predicated region
  $region2: #{lstm_model_forward.2} parent=0 // pred_check
    _
  $region3: #{lstm_model_forward.2} parent=0 // pred_check_branch
    %13 = sbr.rel (0) target = $region5
  $region4: #{lstm_model_forward.2} parent=0 // pred_region
    _
  $region5: #{lstm_model_forward.2} parent=0 // pred_fallthru
    _
  // Predicated region
  $region6: #{lstm_model_forward.2} parent=0 // pred_check
    _
  $region7: #{lstm_model_forward.2} parent=0 // pred_check_branch
    %15 = sbr.rel (0) target = $region9
  $region8: #{lstm_model_forward.2} parent=0 // pred_region
    _
  $region9: #{lstm_model_forward.2} parent=0 // pred_fallthru
    _
  // Predicated region
  $region10: #{lstm_model_forward.2} parent=0 // pred_check
    _
  $region11: #{lstm_model_forward.2} parent=0 // pred_check_branch
    %17 = sbr.rel (0) target = $region13
  $region12: #{lstm_model_forward.2} parent=0 // pred_region
    _
  $region13: #{lstm_model_forward.2} parent=0 // pred_fallthru
    _
  // Predicated region
  $region14: #{lstm_model_forward.2} parent=0 // pred_check
    _
  $region15: #{lstm_model_forward.2} parent=0 // pred_check_branch
    %19 = sbr.rel (0) target = $region17
  $region16: #{lstm_model_forward.2} parent=0 // pred_region
    _
  $region17: #{lstm_model_forward.2} parent=0 // pred_fallthru
    _
  // Predicated region
  $region18: #{lstm_model_forward.2} parent=0 // pred_check
    _
  $region19: #{lstm_model_forward.2} parent=0 // pred_check_branch
    %21 = sbr.rel (0) target = $region21
  $region20: #{lstm_model_forward.2} parent=0 // pred_region
    _
  $region21: #{lstm_model_forward.2} parent=0 // pred_fallthru
    _
  // Predicated region
  $region22: #{lstm_model_forward.2} parent=0 // pred_check
    _
  $region23: #{lstm_model_forward.2} parent=0 // pred_check_branch
    %23 = sbr.rel (0) target = $region25
  $region24: #{lstm_model_forward.2} parent=0 // pred_region
    _
  $region25: #{lstm_model_forward.2} parent=0 // pred_fallthru
    _
  // Predicated region
  $region26: #{lstm_model_forward.2} parent=0 // pred_check
    _
  $region27: #{lstm_model_forward.2} parent=0 // pred_check_branch
    %25 = sbr.rel (0) target = $region29
  $region28: #{lstm_model_forward.2} parent=0 // pred_region
    _
  $region29: #{lstm_model_forward.2} parent=0 // pred_fallthru
    _
  %v26 = vld [vmem:[%s0] sm:$0xff]
  %v27 = vld [vmem:[%s0 + $0x8] sm:$0xff]
  %v28 = vld [vmem:[%s1] sm:$0xff]
  %v29 = vld [vmem:[%s1 + $0x8] sm:$0xff]
  %v30 = vld [vmem:[%s1 + $0x10] sm:$0xff]
  %v31 = vld [vmem:[%s1 + $0x18] sm:$0xff]
  %v32 = vld [vmem:[%s2] sm:$0x1]
  %v34 = vperm.slane %v32, 0
  %vm36 = vcmask 261120
  %v38 = vsel %vm36, %v26, 0
  %v41 = vsel %vm36, %v27, 0
  %43 = vmatpush.msra.mxu0 0.0
  %44 = vmatpush.msra.mxu0 0.0
  %45 = vmatpush.msra.mxu0 0.0
  %46 = vmatpush.msra.mxu0 0.0
  %47 = vmatpush.msra.mxu0 0.0
  %48 = vmatpush.msra.mxu0 0.0
  %49 = vmatpush.msra.mxu0 0.0
  %50 = vmatpush.msra.mxu0 0.0
  %51 = vmatpush.msra.mxu0 0.0
  %52 = vmatpush.msra.mxu0 0.0
  %53 = vmatpush.msra.mxu0 0.0
  %54 = vmatpush.msra.mxu0 0.0
  %55 = vmatpush.msra.mxu0 %v31
  %56 = vmatpush.msra.mxu0 %v30
  %57 = vmatpush.msra.mxu0 %v29
  %58 = vmatpush.msra.mxu0 %v28
  %59 = vmatmul.f32.gmra.mxu0 %v38
  %v60 = vpop.f32.mrf.mxu0
  %v61 = vadd.f32 %v34, %v60
  %62 = vmatmul.f32.gmra.mxu0 %v41
  %v63 = vpop.f32.mrf.mxu0
  %v64 = vadd.f32 %v34, %v63
  %65 = vdwg.mxu0
  %vm66 = vcmask 130048
  %v67 = vsel %vm66, %v61, -inf
  %68 = vmax.xlane.f32.xlu0 %v67
  %v69 = vpop.xlane.xlu0 %68
  %v70 = vsel %vm66, %v64, -inf
  %71 = vmax.xlane.f32.xlu0 %v70
  %v72 = vpop.xlane.xlu0 %71
  %v73 = vsub.f32 %v61, %v69
  %v74 = vsub.f32 %v64, %v72
  %v75 = vmul.f32 %v73, 1.442695
  %v76 = vpow.pop %v75
  %v77 = vmul.f32 %v74, 1.442695
  %v78 = vpow.pop %v77
  %v79 = vsel %vm66, %v76, 0.0
  %80 = vadd.xlane.f32.xlu0 %v79
  %v81 = vpop.xlane.xlu0 %80
  %v82 = vsel %vm66, %v78, 0.0
  %83 = vadd.xlane.f32.xlu0 %v82
  %v84 = vpop.xlane.xlu0 %83
  %v85 = vrcp.pop %v81
  %v86 = vmul.f32 %v81, %v85
  %v87 = vsub.f32 1.0, %v86
  %v88 = vmul.f32 %v85, %v87
  %v89 = vadd.f32 %v85, %v88
  %vm90 = vweird.f32 %v81
  %vm91 = vweird.f32 %v85
  %vm92 = vmor %vm90, %vm91
  %v93 = vsel %vm92, %v85, %v89
  %v94 = vand.u32 2147483647, %v81
  %vm95 = vcmp.eq.f32.partialorder %v94, 8.507059e+37
  %v96 = vand.u32 %v81, 2147483648
  %v97 = vor.u32 1.1754944e-38, %v96
  %v98 = vsel %vm95, %v97, %v93
  %v99 = vrcp.pop %v84
  %v100 = vmul.f32 %v84, %v99
  %v101 = vsub.f32 1.0, %v100
  %v102 = vmul.f32 %v99, %v101
  %v103 = vadd.f32 %v99, %v102
  %vm104 = vweird.f32 %v84
  %vm105 = vweird.f32 %v99
  %vm106 = vmor %vm104, %vm105
  %v107 = vsel %vm106, %v99, %v103
  %v108 = vand.u32 2147483647, %v84
  %vm109 = vcmp.eq.f32.partialorder %v108, 8.507059e+37
  %v110 = vand.u32 %v84, 2147483648
  %v111 = vor.u32 1.1754944e-38, %v110
  %v112 = vsel %vm109, %v111, %v107
  %v113 = vmul.f32 %v76, %v98
  %v114 = vmul.f32 %v78, %v112
  %v115 = vld [vmem:[%s3] sm:$0xff]
  %v116 = vld [vmem:[%s3 + $0x8] sm:$0xff]
  %v117 = vld [vmem:[%s3 + $0x10] sm:$0xff]
  %v118 = vld [vmem:[%s3 + $0x18] sm:$0xff]
  %v119 = vld [vmem:[%s4] sm:$0x1]
  %v121 = vperm.slane %v119, 0
  %123 = vmatpush.msra.mxu0 0.0
  %124 = vmatpush.msra.mxu0 0.0
  %125 = vmatpush.msra.mxu0 0.0
  %126 = vmatpush.msra.mxu0 0.0
  %127 = vmatpush.msra.mxu0 0.0
  %128 = vmatpush.msra.mxu0 0.0
  %129 = vmatpush.msra.mxu0 0.0
  %130 = vmatpush.msra.mxu0 0.0
  %131 = vmatpush.msra.mxu0 0.0
  %132 = vmatpush.msra.mxu0 0.0
  %133 = vmatpush.msra.mxu0 0.0
  %134 = vmatpush.msra.mxu0 0.0
  %135 = vmatpush.msra.mxu0 %v118
  %136 = vmatpush.msra.mxu0 %v117
  %137 = vmatpush.msra.mxu0 %v116
  %138 = vmatpush.msra.mxu0 %v115
  %139 = vmatmul.f32.gmra.mxu0 %v38
  %v140 = vpop.f32.mrf.mxu0
  %v141 = vadd.f32 %v121, %v140
  %142 = vmatmul.f32.gmra.mxu0 %v41
  %v143 = vpop.f32.mrf.mxu0
  %v144 = vadd.f32 %v121, %v143
  %145 = vdwg.mxu0
  %v146 = vsel %vm66, %v141, -inf
  %147 = vmax.xlane.f32.xlu0 %v146
  %v148 = vpop.xlane.xlu0 %147
  %v149 = vsel %vm66, %v144, -inf
  %150 = vmax.xlane.f32.xlu0 %v149
  %v151 = vpop.xlane.xlu0 %150
  %v152 = vsub.f32 %v141, %v148
  %v153 = vsub.f32 %v144, %v151
  %v154 = vmul.f32 %v152, 1.442695
  %v155 = vpow.pop %v154
  %v156 = vmul.f32 %v153, 1.442695
  %v157 = vpow.pop %v156
  %v158 = vsel %vm66, %v155, 0.0
  %159 = vadd.xlane.f32.xlu0 %v158
  %v160 = vpop.xlane.xlu0 %159
  %v161 = vsel %vm66, %v157, 0.0
  %162 = vadd.xlane.f32.xlu0 %v161
  %v163 = vpop.xlane.xlu0 %162
  %v164 = vrcp.pop %v160
  %v165 = vmul.f32 %v160, %v164
  %v166 = vsub.f32 1.0, %v165
  %v167 = vmul.f32 %v164, %v166
  %v168 = vadd.f32 %v164, %v167
  %vm169 = vweird.f32 %v160
  %vm170 = vweird.f32 %v164
  %vm171 = vmor %vm169, %vm170
  %v172 = vsel %vm171, %v164, %v168
  %v173 = vand.u32 2147483647, %v160
  %vm174 = vcmp.eq.f32.partialorder %v173, 8.507059e+37
  %v175 = vand.u32 %v160, 2147483648
  %v176 = vor.u32 1.1754944e-38, %v175
  %v177 = vsel %vm174, %v176, %v172
  %v178 = vrcp.pop %v163
  %v179 = vmul.f32 %v163, %v178
  %v180 = vsub.f32 1.0, %v179
  %v181 = vmul.f32 %v178, %v180
  %v182 = vadd.f32 %v178, %v181
  %vm183 = vweird.f32 %v163
  %vm184 = vweird.f32 %v178
  %vm185 = vmor %vm183, %vm184
  %v186 = vsel %vm185, %v178, %v182
  %v187 = vand.u32 2147483647, %v163
  %vm188 = vcmp.eq.f32.partialorder %v187, 8.507059e+37
  %v189 = vand.u32 %v163, 2147483648
  %v190 = vor.u32 1.1754944e-38, %v189
  %v191 = vsel %vm188, %v190, %v186
  %v192 = vmul.f32 %v155, %v177
  %v193 = vmul.f32 %v157, %v191
  %v194 = vld [vmem:[%s5] sm:$0xff]
  %v195 = vld [vmem:[%s5 + $0x8] sm:$0xff]
  %v196 = vld [vmem:[%s5 + $0x10] sm:$0xff]
  %v197 = vld [vmem:[%s5 + $0x18] sm:$0xff]
  %v198 = vld [vmem:[%s6] sm:$0x1]
  %v200 = vperm.slane %v198, 0
  %202 = vmatpush.msra.mxu0 0.0
  %203 = vmatpush.msra.mxu0 0.0
  %204 = vmatpush.msra.mxu0 0.0
  %205 = vmatpush.msra.mxu0 0.0
  %206 = vmatpush.msra.mxu0 0.0
  %207 = vmatpush.msra.mxu0 0.0
  %208 = vmatpush.msra.mxu0 0.0
  %209 = vmatpush.msra.mxu0 0.0
  %210 = vmatpush.msra.mxu0 0.0
  %211 = vmatpush.msra.mxu0 0.0
  %212 = vmatpush.msra.mxu0 0.0
  %213 = vmatpush.msra.mxu0 0.0
  %214 = vmatpush.msra.mxu0 %v197
  %215 = vmatpush.msra.mxu0 %v196
  %216 = vmatpush.msra.mxu0 %v195
  %217 = vmatpush.msra.mxu0 %v194
  %218 = vmatmul.f32.gmra.mxu0 %v38
  %v219 = vpop.f32.mrf.mxu0
  %v220 = vadd.f32 %v200, %v219
  %221 = vmatmul.f32.gmra.mxu0 %v41
  %v222 = vpop.f32.mrf.mxu0
  %v223 = vadd.f32 %v200, %v222
  %224 = vdwg.mxu0
  %v226 = vsel %vm66, %v113, 0
  %v229 = vsel %vm66, %v192, 0
  %231 = vmatpush.xpose.msra.mxu0 0.0
  %232 = vmatpush.xpose.msra.mxu0 0.0
  %233 = vmatpush.xpose.msra.mxu0 0.0
  %234 = vmatpush.xpose.msra.mxu0 0.0
  %235 = vmatpush.xpose.msra.mxu0 0.0
  %236 = vmatpush.xpose.msra.mxu0 0.0
  %237 = vmatpush.xpose.msra.mxu0 0.0
  %238 = vmatpush.xpose.msra.mxu0 0.0
  %239 = vmatpush.xpose.msra.mxu0 0.0
  %240 = vmatpush.xpose.msra.mxu0 0.0
  %241 = vmatpush.xpose.msra.mxu0 0.0
  %242 = vmatpush.xpose.msra.mxu0 0.0
  %243 = vmatpush.xpose.msra.mxu0 0.0
  %244 = vmatpush.xpose.msra.mxu0 0.0
  %245 = vmatpush.xpose.msra.mxu0 0.0
  %246 = vmatpush.xpose.msra.mxu0 %v229
  %247 = vmatmul.f32.gmra.mxu0 %v226
  %v248 = vpop.f32.mrf.mxu0
  %v249 = vadd.f32 0.0, %v248
  %250 = vdwg.mxu0
  %v252 = vsel %vm66, %v114, 0
  %v255 = vsel %vm66, %v193, 0
  %257 = vmatpush.xpose.msra.mxu0 0.0
  %258 = vmatpush.xpose.msra.mxu0 0.0
  %259 = vmatpush.xpose.msra.mxu0 0.0
  %260 = vmatpush.xpose.msra.mxu0 0.0
  %261 = vmatpush.xpose.msra.mxu0 0.0
  %262 = vmatpush.xpose.msra.mxu0 0.0
  %263 = vmatpush.xpose.msra.mxu0 0.0
  %264 = vmatpush.xpose.msra.mxu0 0.0
  %265 = vmatpush.xpose.msra.mxu0 0.0
  %266 = vmatpush.xpose.msra.mxu0 0.0
  %267 = vmatpush.xpose.msra.mxu0 0.0
  %268 = vmatpush.xpose.msra.mxu0 0.0
  %269 = vmatpush.xpose.msra.mxu0 0.0
  %270 = vmatpush.xpose.msra.mxu0 0.0
  %271 = vmatpush.xpose.msra.mxu0 0.0
  %272 = vmatpush.xpose.msra.mxu0 %v255
  %273 = vmatmul.f32.gmra.mxu0 %v252
  %v274 = vpop.f32.mrf.mxu0
  %v275 = vadd.f32 0.0, %v274
  %276 = vdwg.mxu0
  %vm277 = vcmask 64512
  %v279 = vsel %vm277, %v249, 0
  %281 = vmatpush.msra.mxu0 0.0
  %282 = vmatpush.msra.mxu0 0.0
  %283 = vmatpush.msra.mxu0 0.0
  %284 = vmatpush.msra.mxu0 0.0
  %285 = vmatpush.msra.mxu0 0.0
  %286 = vmatpush.msra.mxu0 0.0
  %287 = vmatpush.msra.mxu0 0.0
  %288 = vmatpush.msra.mxu0 0.0
  %289 = vmatpush.msra.mxu0 0.0
  %290 = vmatpush.msra.mxu0 0.0
  %291 = vmatpush.msra.mxu0 0.0
  %292 = vmatpush.msra.mxu0 0.0
  %293 = vmatpush.msra.mxu0 0.0
  %294 = vmatpush.msra.mxu0 0.0
  %295 = vmatpush.msra.mxu0 0.0
  %296 = vmatpush.msra.mxu0 %v220
  %297 = vmatmul.f32.gmra.mxu0 %v279
  %v298 = vpop.f32.mrf.mxu0
  %v299 = vadd.f32 0.0, %v298
  %300 = vdwg.mxu0
  %v302 = vsel %vm277, %v275, 0
  %304 = vmatpush.msra.mxu0 0.0
  %305 = vmatpush.msra.mxu0 0.0
  %306 = vmatpush.msra.mxu0 0.0
  %307 = vmatpush.msra.mxu0 0.0
  %308 = vmatpush.msra.mxu0 0.0
  %309 = vmatpush.msra.mxu0 0.0
  %310 = vmatpush.msra.mxu0 0.0
  %311 = vmatpush.msra.mxu0 0.0
  %312 = vmatpush.msra.mxu0 0.0
  %313 = vmatpush.msra.mxu0 0.0
  %314 = vmatpush.msra.mxu0 0.0
  %315 = vmatpush.msra.mxu0 0.0
  %316 = vmatpush.msra.mxu0 0.0
  %317 = vmatpush.msra.mxu0 0.0
  %318 = vmatpush.msra.mxu0 0.0
  %319 = vmatpush.msra.mxu0 %v223
  %320 = vmatmul.f32.gmra.mxu0 %v302
  %v321 = vpop.f32.mrf.mxu0
  %v322 = vadd.f32 0.0, %v321
  %323 = vdwg.mxu0
  %v324 = vadd.f32 %v26, %v299
  %v325 = vadd.f32 %v27, %v322
  %326 = vst.msk [vmem:[%s7] sm:$0xff] %vm36, %v324
  %327 = vst.msk [vmem:[%s7 + $0x8] sm:$0xff] %vm36, %v325
  // Predicated region
  $region30: #{lstm_model_forward.2} parent=0 // pred_check
    _
  $region31: #{lstm_model_forward.2} parent=0 // pred_check_branch
    %329 = sbr.rel (0) target = $region33
  $region32: #{lstm_model_forward.2} parent=0 // pred_region
    _
  $region33: #{lstm_model_forward.2} parent=0 // pred_fallthru
    _
  // Predicated region
  $region34: #{lstm_model_forward.2} parent=0 // pred_check
    _
  $region35: #{lstm_model_forward.2} parent=0 // pred_check_branch
    %331 = sbr.rel (0) target = $region37
  $region36: #{lstm_model_forward.2} parent=0 // pred_region
    _
  $region37: #{lstm_model_forward.2} parent=0 // pred_fallthru
    _

// kernel: lstm_model_forward.3
$region0: #{lstm_model_forward.3}
  #allocation0 [shape = 'u32[]', space=smem, size = 0x4, offset = 0x4, fixed_abs, tag = 'smem constant byte address 0x4 - core index']
  #allocation1 [shape = 'u32[72,128]{1,0:T(1,128)}', space=vmem, size = 0x9000, scoped, tag = 'internal scratch']
  #allocation2 [shape = 'f32[8,2,512]{2,1,0:T(2,128)}', space=vmem, size = 0x8000, scoped, tag = 'scratch operand']
  #allocation3 [shape = 'f32[8,2,128]{2,1,0:T(2,128)}', space=vmem, size = 0x2000, scoped, tag = 'scratch operand']
  %s0 = inlined_call_operand.vmem [shape: f32[8,2,32], index: 0, kind: input, shape index: {}]
  %s1 = inlined_call_operand.vmem [shape: f32[32,512], index: 1, kind: input, shape index: {}]
  %s2 = inlined_call_operand.vmem [shape: f32[128,512], index: 2, kind: input, shape index: {}]
  %s3 = inlined_call_operand.vmem [shape: f32[1,512], index: 3, kind: input, shape index: {}]
  %s4 = inlined_call_operand.vmem [shape: f32[128,8], index: 4, kind: input, shape index: {}]
  %s5 = inlined_call_operand.vmem [shape: f32[1,8], index: 5, kind: input, shape index: {}]
  %s6 = inlined_call_operand.vmem [shape: f32[8,2,8], index: 6, kind: output, shape index: {}]
  %s7 = sld [smem:[#allocation0]]
  $region34: #{lstm_model_forward.3} parent=0
    _
  %s9 = ssub.s32 1, %s7
  %s10 = scalar_select 0, %s9, %s7
  // Predicated region
  $region2: #{lstm_model_forward.3} parent=0 // pred_check
    _
  $region3: #{lstm_model_forward.3} parent=0 // pred_check_branch
    %12 = sbr.rel (0) target = $region5
  $region4: #{lstm_model_forward.3} parent=0 // pred_region
    _
  $region5: #{lstm_model_forward.3} parent=0 // pred_fallthru
    _
  // Predicated region
  $region6: #{lstm_model_forward.3} parent=0 // pred_check
    _
  $region7: #{lstm_model_forward.3} parent=0 // pred_check_branch
    %14 = sbr.rel (0) target = $region9
  $region8: #{lstm_model_forward.3} parent=0 // pred_region
    _
  $region9: #{lstm_model_forward.3} parent=0 // pred_fallthru
    _
  // Predicated region
  $region10: #{lstm_model_forward.3} parent=0 // pred_check
    _
  $region11: #{lstm_model_forward.3} parent=0 // pred_check_branch
    %16 = sbr.rel (0) target = $region13
  $region12: #{lstm_model_forward.3} parent=0 // pred_region
    _
  $region13: #{lstm_model_forward.3} parent=0 // pred_fallthru
    _
  // Predicated region
  $region14: #{lstm_model_forward.3} parent=0 // pred_check
    _
  $region15: #{lstm_model_forward.3} parent=0 // pred_check_branch
    %18 = sbr.rel (0) target = $region17
  $region16: #{lstm_model_forward.3} parent=0 // pred_region
    _
  $region17: #{lstm_model_forward.3} parent=0 // pred_fallthru
    _
  // Predicated region
  $region18: #{lstm_model_forward.3} parent=0 // pred_check
    _
  $region19: #{lstm_model_forward.3} parent=0 // pred_check_branch
    %20 = sbr.rel (0) target = $region21
  $region20: #{lstm_model_forward.3} parent=0 // pred_region
    _
  $region21: #{lstm_model_forward.3} parent=0 // pred_fallthru
    _
  // Predicated region
  $region22: #{lstm_model_forward.3} parent=0 // pred_check
    _
  $region23: #{lstm_model_forward.3} parent=0 // pred_check_branch
    %22 = sbr.rel (0) target = $region25
  $region24: #{lstm_model_forward.3} parent=0 // pred_region
    _
  $region25: #{lstm_model_forward.3} parent=0 // pred_fallthru
    _
  %v23 = vld [vmem:[%s0] sm:$0x3]
  %v24 = vld [vmem:[%s0 + $0x2] sm:$0x3]
  %v25 = vld [vmem:[%s0 + $0x4] sm:$0x3]
  %v26 = vld [vmem:[%s0 + $0x6] sm:$0x3]
  %v27 = vld [vmem:[%s0 + $0x8] sm:$0x3]
  %v28 = vld [vmem:[%s0 + $0xa] sm:$0x3]
  %v29 = vld [vmem:[%s0 + $0xc] sm:$0x3]
  %v30 = vld [vmem:[%s0 + $0xe] sm:$0x3]
  %v31 = vld [vmem:[%s1] sm:$0xff]
  %v32 = vld [vmem:[%s1 + $0x8] sm:$0xff]
  %v33 = vld [vmem:[%s1 + $0x10] sm:$0xff]
  %v34 = vld [vmem:[%s1 + $0x18] sm:$0xff]
  %v35 = vld [vmem:[%s1 + $0x20] sm:$0xff]
  %v36 = vld [vmem:[%s1 + $0x28] sm:$0xff]
  %v37 = vld [vmem:[%s1 + $0x30] sm:$0xff]
  %v38 = vld [vmem:[%s1 + $0x38] sm:$0xff]
  %v39 = vld [vmem:[%s1 + $0x40] sm:$0xff]
  %v40 = vld [vmem:[%s1 + $0x48] sm:$0xff]
  %v41 = vld [vmem:[%s1 + $0x50] sm:$0xff]
  %v42 = vld [vmem:[%s1 + $0x58] sm:$0xff]
  %v43 = vld [vmem:[%s1 + $0x60] sm:$0xff]
  %v44 = vld [vmem:[%s1 + $0x68] sm:$0xff]
  %v45 = vld [vmem:[%s1 + $0x70] sm:$0xff]
  %v46 = vld [vmem:[%s1 + $0x78] sm:$0xff]
  %v47 = vld [vmem:[%s3] sm:$0xf]
  %v49 = vperm.slane %v47, 0
  %v50 = vperm.slane %v47, 1
  %v51 = vperm.slane %v47, 2
  %v52 = vperm.slane %v47, 3
  %65 = vst [vmem:[#allocation1] ss:$4 sm:$0xff] %v23
  %s66 = scalar_lea.vmem [#allocation1], 1
  %67 = vst [vmem:[%s66] ss:$4 sm:$0xff] %v24
  %s68 = scalar_lea.vmem [#allocation1], 2
  %69 = vst [vmem:[%s68] ss:$4 sm:$0xff] %v25
  %s70 = scalar_lea.vmem [#allocation1], 3
  %71 = vst [vmem:[%s70] ss:$4 sm:$0xff] %v26
  %s72 = scalar_lea.vmem [#allocation1], 32
  %73 = vst [vmem:[%s72] ss:$4 sm:$0xff] %v27
  %s74 = scalar_lea.vmem [#allocation1], 33
  %75 = vst [vmem:[%s74] ss:$4 sm:$0xff] %v28
  %s76 = scalar_lea.vmem [#allocation1], 34
  %77 = vst [vmem:[%s76] ss:$4 sm:$0xff] %v29
  %s78 = scalar_lea.vmem [#allocation1], 35
  %79 = vst [vmem:[%s78] ss:$4 sm:$0xff] %v30
  %v80 = vld.sshfl [vmem:[#allocation1] sm:$0xff pattern:$0x73625140]
  %v81 = vld.sshfl [vmem:[#allocation1 + $0x20] sm:$0xff pattern:$0x73625140]
  %vm82 = vcmask 261120
  %v83 = vsel %vm82, %v80, 0
  %v85 = vsel %vm82, %v81, 0
  %87 = vmatpush.msra.mxu0 0.0
  %88 = vmatpush.msra.mxu0 0.0
  %89 = vmatpush.msra.mxu0 0.0
  %90 = vmatpush.msra.mxu0 0.0
  %91 = vmatpush.msra.mxu0 0.0
  %92 = vmatpush.msra.mxu0 0.0
  %93 = vmatpush.msra.mxu0 0.0
  %94 = vmatpush.msra.mxu0 0.0
  %95 = vmatpush.msra.mxu0 0.0
  %96 = vmatpush.msra.mxu0 0.0
  %97 = vmatpush.msra.mxu0 0.0
  %98 = vmatpush.msra.mxu0 0.0
  %99 = vmatpush.msra.mxu0 %v43
  %100 = vmatpush.msra.mxu0 %v39
  %101 = vmatpush.msra.mxu0 %v35
  %102 = vmatpush.msra.mxu0 %v31
  %103 = vmatmul.f32.gmra.mxu0 %v83
  %v104 = vpop.f32.mrf.mxu0
  %v105 = vadd.f32 %v49, %v104
  %106 = vmatmul.f32.gmra.mxu0 %v85
  %v107 = vpop.f32.mrf.mxu0
  %v108 = vadd.f32 %v49, %v107
  %109 = vdwg.mxu0
  %110 = vmatpush.msra.mxu0 0.0
  %111 = vmatpush.msra.mxu0 0.0
  %112 = vmatpush.msra.mxu0 0.0
  %113 = vmatpush.msra.mxu0 0.0
  %114 = vmatpush.msra.mxu0 0.0
  %115 = vmatpush.msra.mxu0 0.0
  %116 = vmatpush.msra.mxu0 0.0
  %117 = vmatpush.msra.mxu0 0.0
  %118 = vmatpush.msra.mxu0 0.0
  %119 = vmatpush.msra.mxu0 0.0
  %120 = vmatpush.msra.mxu0 0.0
  %121 = vmatpush.msra.mxu0 0.0
  %122 = vmatpush.msra.mxu0 %v44
  %123 = vmatpush.msra.mxu0 %v40
  %124 = vmatpush.msra.mxu0 %v36
  %125 = vmatpush.msra.mxu0 %v32
  %126 = vmatmul.f32.gmra.mxu0 %v83
  %v127 = vpop.f32.mrf.mxu0
  %v128 = vadd.f32 %v50, %v127
  %129 = vmatmul.f32.gmra.mxu0 %v85
  %v130 = vpop.f32.mrf.mxu0
  %v131 = vadd.f32 %v50, %v130
  %132 = vdwg.mxu0
  %133 = vmatpush.msra.mxu0 0.0
  %134 = vmatpush.msra.mxu0 0.0
  %135 = vmatpush.msra.mxu0 0.0
  %136 = vmatpush.msra.mxu0 0.0
  %137 = vmatpush.msra.mxu0 0.0
  %138 = vmatpush.msra.mxu0 0.0
  %139 = vmatpush.msra.mxu0 0.0
  %140 = vmatpush.msra.mxu0 0.0
  %141 = vmatpush.msra.mxu0 0.0
  %142 = vmatpush.msra.mxu0 0.0
  %143 = vmatpush.msra.mxu0 0.0
  %144 = vmatpush.msra.mxu0 0.0
  %145 = vmatpush.msra.mxu0 %v45
  %146 = vmatpush.msra.mxu0 %v41
  %147 = vmatpush.msra.mxu0 %v37
  %148 = vmatpush.msra.mxu0 %v33
  %149 = vmatmul.f32.gmra.mxu0 %v83
  %v150 = vpop.f32.mrf.mxu0
  %v151 = vadd.f32 %v51, %v150
  %152 = vmatmul.f32.gmra.mxu0 %v85
  %v153 = vpop.f32.mrf.mxu0
  %v154 = vadd.f32 %v51, %v153
  %155 = vdwg.mxu0
  %156 = vmatpush.msra.mxu0 0.0
  %157 = vmatpush.msra.mxu0 0.0
  %158 = vmatpush.msra.mxu0 0.0
  %159 = vmatpush.msra.mxu0 0.0
  %160 = vmatpush.msra.mxu0 0.0
  %161 = vmatpush.msra.mxu0 0.0
  %162 = vmatpush.msra.mxu0 0.0
  %163 = vmatpush.msra.mxu0 0.0
  %164 = vmatpush.msra.mxu0 0.0
  %165 = vmatpush.msra.mxu0 0.0
  %166 = vmatpush.msra.mxu0 0.0
  %167 = vmatpush.msra.mxu0 0.0
  %168 = vmatpush.msra.mxu0 %v46
  %169 = vmatpush.msra.mxu0 %v42
  %170 = vmatpush.msra.mxu0 %v38
  %171 = vmatpush.msra.mxu0 %v34
  %172 = vmatmul.f32.gmra.mxu0 %v83
  %v173 = vpop.f32.mrf.mxu0
  %v174 = vadd.f32 %v52, %v173
  %175 = vmatmul.f32.gmra.mxu0 %v85
  %v176 = vpop.f32.mrf.mxu0
  %v177 = vadd.f32 %v52, %v176
  %178 = vdwg.mxu0
  %v187 = vrot.slane %v128, 6
  %v188 = vrot.slane %v151, 4
  %v189 = vrot.slane %v174, 2
  %v190 = vrot.slane %v131, 6
  %v191 = vrot.slane %v154, 4
  %v192 = vrot.slane %v177, 2
  %vm193 = vcmask 1041408
  %v194 = vsel %vm193, %v105, %v187
  %vm195 = vcmask 1045508
  %v196 = vsel %vm195, %v188, %v189
  %vm197 = vcmask 1043456
  %v198 = vsel %vm197, %v194, %v196
  %vm199 = vcmask 1043458
  %v200 = vsel %vm199, %v105, %v187
  %vm201 = vcmask 1045504
  %v202 = vsel %vm201, %v189, %v188
  %vm203 = vcmask 1045506
  %v204 = vsel %vm203, %v200, %v202
  %v205 = vrot.slane %v204, 2
  %v206 = vsel %vm195, %v105, %v187
  %v207 = vsel %vm193, %v188, %v189
  %v208 = vsel %vm197, %v207, %v206
  %v209 = vrot.slane %v208, 4
  %v210 = vsel %vm201, %v187, %v105
  %v211 = vsel %vm199, %v188, %v189
  %v212 = vsel %vm203, %v211, %v210
  %v213 = vrot.slane %v212, 6
  %v214 = vsel %vm193, %v108, %v190
  %v215 = vsel %vm195, %v191, %v192
  %v216 = vsel %vm197, %v214, %v215
  %v217 = vsel %vm199, %v108, %v190
  %v218 = vsel %vm201, %v192, %v191
  %v219 = vsel %vm203, %v217, %v218
  %v220 = vrot.slane %v219, 2
  %v221 = vsel %vm195, %v108, %v190
  %v222 = vsel %vm193, %v191, %v192
  %v223 = vsel %vm197, %v222, %v221
  %v224 = vrot.slane %v223, 4
  %v225 = vsel %vm201, %v190, %v108
  %v226 = vsel %vm199, %v191, %v192
  %v227 = vsel %vm203, %v226, %v225
  %v228 = vrot.slane %v227, 6
  %237 = vst [vmem:[#allocation2] sm:$0xff] %v198
  %238 = vst [vmem:[#allocation2 + $0x8] sm:$0xff] %v205
  %239 = vst [vmem:[#allocation2 + $0x10] sm:$0xff] %v209
  %240 = vst [vmem:[#allocation2 + $0x18] sm:$0xff] %v213
  %241 = vst [vmem:[#allocation2 + $0x20] sm:$0xff] %v216
  %242 = vst [vmem:[#allocation2 + $0x28] sm:$0xff] %v220
  %243 = vst [vmem:[#allocation2 + $0x30] sm:$0xff] %v224
  %244 = vst [vmem:[#allocation2 + $0x38] sm:$0xff] %v228
  %v245 = vld [vmem:[%s2] sm:$0xff]
  %v246 = vld [vmem:[%s2 + $0x8] sm:$0xff]
  %v247 = vld [vmem:[%s2 + $0x10] sm:$0xff]
  %v248 = vld [vmem:[%s2 + $0x18] sm:$0xff]
  %v249 = vld [vmem:[%s2 + $0x20] sm:$0xff]
  %v250 = vld [vmem:[%s2 + $0x28] sm:$0xff]
  %v251 = vld [vmem:[%s2 + $0x30] sm:$0xff]
  %v252 = vld [vmem:[%s2 + $0x38] sm:$0xff]
  %v253 = vld [vmem:[%s2 + $0x40] sm:$0xff]
  %v254 = vld [vmem:[%s2 + $0x48] sm:$0xff]
  %v255 = vld [vmem:[%s2 + $0x50] sm:$0xff]
  %v256 = vld [vmem:[%s2 + $0x58] sm:$0xff]
  %v257 = vld [vmem:[%s2 + $0x60] sm:$0xff]
  %v258 = vld [vmem:[%s2 + $0x68] sm:$0xff]
  %v259 = vld [vmem:[%s2 + $0x70] sm:$0xff]
  %v260 = vld [vmem:[%s2 + $0x78] sm:$0xff]
  %v261 = vld [vmem:[%s2 + $0x80] sm:$0xff]
  %v262 = vld [vmem:[%s2 + $0x88] sm:$0xff]
  %v263 = vld [vmem:[%s2 + $0x90] sm:$0xff]
  %v264 = vld [vmem:[%s2 + $0x98] sm:$0xff]
  %v265 = vld [vmem:[%s2 + $0xa0] sm:$0xff]
  %v266 = vld [vmem:[%s2 + $0xa8] sm:$0xff]
  %v267 = vld [vmem:[%s2 + $0xb0] sm:$0xff]
  %v268 = vld [vmem:[%s2 + $0xb8] sm:$0xff]
  %v269 = vld [vmem:[%s2 + $0xc0] sm:$0xff]
  %v270 = vld [vmem:[%s2 + $0xc8] sm:$0xff]
  %v271 = vld [vmem:[%s2 + $0xd0] sm:$0xff]
  %v272 = vld [vmem:[%s2 + $0xd8] sm:$0xff]
  %v273 = vld [vmem:[%s2 + $0xe0] sm:$0xff]
  %v274 = vld [vmem:[%s2 + $0xe8] sm:$0xff]
  %v275 = vld [vmem:[%s2 + $0xf0] sm:$0xff]
  %v276 = vld [vmem:[%s2 + $0xf8] sm:$0xff]
  %v277 = vld [vmem:[%s2 + $0x100] sm:$0xff]
  %v278 = vld [vmem:[%s2 + $0x108] sm:$0xff]
  %v279 = vld [vmem:[%s2 + $0x110] sm:$0xff]
  %v280 = vld [vmem:[%s2 + $0x118] sm:$0xff]
  %v281 = vld [vmem:[%s2 + $0x120] sm:$0xff]
  %v282 = vld [vmem:[%s2 + $0x128] sm:$0xff]
  %v283 = vld [vmem:[%s2 + $0x130] sm:$0xff]
  %v284 = vld [vmem:[%s2 + $0x138] sm:$0xff]
  %v285 = vld [vmem:[%s2 + $0x140] sm:$0xff]
  %v286 = vld [vmem:[%s2 + $0x148] sm:$0xff]
  %v287 = vld [vmem:[%s2 + $0x150] sm:$0xff]
  %v288 = vld [vmem:[%s2 + $0x158] sm:$0xff]
  %v289 = vld [vmem:[%s2 + $0x160] sm:$0xff]
  %v290 = vld [vmem:[%s2 + $0x168] sm:$0xff]
  %v291 = vld [vmem:[%s2 + $0x170] sm:$0xff]
  %v292 = vld [vmem:[%s2 + $0x178] sm:$0xff]
  %v293 = vld [vmem:[%s2 + $0x180] sm:$0xff]
  %v294 = vld [vmem:[%s2 + $0x188] sm:$0xff]
  %v295 = vld [vmem:[%s2 + $0x190] sm:$0xff]
  %v296 = vld [vmem:[%s2 + $0x198] sm:$0xff]
  %v297 = vld [vmem:[%s2 + $0x1a0] sm:$0xff]
  %v298 = vld [vmem:[%s2 + $0x1a8] sm:$0xff]
  %v299 = vld [vmem:[%s2 + $0x1b0] sm:$0xff]
  %v300 = vld [vmem:[%s2 + $0x1b8] sm:$0xff]
  %v301 = vld [vmem:[%s2 + $0x1c0] sm:$0xff]
  %v302 = vld [vmem:[%s2 + $0x1c8] sm:$0xff]
  %v303 = vld [vmem:[%s2 + $0x1d0] sm:$0xff]
  %v304 = vld [vmem:[%s2 + $0x1d8] sm:$0xff]
  %v305 = vld [vmem:[%s2 + $0x1e0] sm:$0xff]
  %v306 = vld [vmem:[%s2 + $0x1e8] sm:$0xff]
  %v307 = vld [vmem:[%s2 + $0x1f0] sm:$0xff]
  %v308 = vld [vmem:[%s2 + $0x1f8] sm:$0xff]
  %v309 = vld [vmem:[#allocation2] sm:$0xff]
  %310 = vmatpush.msra.mxu0 %v305
  %311 = vmatpush.msra.mxu0 %v301
  %312 = vmatpush.msra.mxu0 %v297
  %313 = vmatpush.msra.mxu0 %v293
  %314 = vmatpush.msra.mxu0 %v289
  %315 = vmatpush.msra.mxu0 %v285
  %316 = vmatpush.msra.mxu0 %v281
  %317 = vmatpush.msra.mxu0 %v277
  %318 = vmatpush.msra.mxu0 %v273
  %319 = vmatpush.msra.mxu0 %v269
  %320 = vmatpush.msra.mxu0 %v265
  %321 = vmatpush.msra.mxu0 %v261
  %322 = vmatpush.msra.mxu0 %v257
  %323 = vmatpush.msra.mxu0 %v253
  %324 = vmatpush.msra.mxu0 %v249
  %325 = vmatpush.msra.mxu0 %v245
  %326 = vmatmul.f32.gmra.mxu0 0.0
  %v327 = vpop.f32.mrf.mxu0
  %v328 = vadd.f32 0.0, %v327
  %329 = vdwg.mxu0
  %330 = vmatpush.msra.mxu0 %v306
  %331 = vmatpush.msra.mxu0 %v302
  %332 = vmatpush.msra.mxu0 %v298
  %333 = vmatpush.msra.mxu0 %v294
  %334 = vmatpush.msra.mxu0 %v290
  %335 = vmatpush.msra.mxu0 %v286
  %336 = vmatpush.msra.mxu0 %v282
  %337 = vmatpush.msra.mxu0 %v278
  %338 = vmatpush.msra.mxu0 %v274
  %339 = vmatpush.msra.mxu0 %v270
  %340 = vmatpush.msra.mxu0 %v266
  %341 = vmatpush.msra.mxu0 %v262
  %342 = vmatpush.msra.mxu0 %v258
  %343 = vmatpush.msra.mxu0 %v254
  %344 = vmatpush.msra.mxu0 %v250
  %345 = vmatpush.msra.mxu0 %v246
  %346 = vmatmul.f32.gmra.mxu0 0.0
  %v347 = vpop.f32.mrf.mxu0
  %v348 = vadd.f32 0.0, %v347
  %349 = vdwg.mxu0
  %350 = vmatpush.msra.mxu0 %v307
  %351 = vmatpush.msra.mxu0 %v303
  %352 = vmatpush.msra.mxu0 %v299
  %353 = vmatpush.msra.mxu0 %v295
  %354 = vmatpush.msra.mxu0 %v291
  %355 = vmatpush.msra.mxu0 %v287
  %356 = vmatpush.msra.mxu0 %v283
  %357 = vmatpush.msra.mxu0 %v279
  %358 = vmatpush.msra.mxu0 %v275
  %359 = vmatpush.msra.mxu0 %v271
  %360 = vmatpush.msra.mxu0 %v267
  %361 = vmatpush.msra.mxu0 %v263
  %362 = vmatpush.msra.mxu0 %v259
  %363 = vmatpush.msra.mxu0 %v255
  %364 = vmatpush.msra.mxu0 %v251
  %365 = vmatpush.msra.mxu0 %v247
  %366 = vmatmul.f32.gmra.mxu0 0.0
  %v367 = vpop.f32.mrf.mxu0
  %v368 = vadd.f32 0.0, %v367
  %369 = vdwg.mxu0
  %370 = vmatpush.msra.mxu0 %v308
  %371 = vmatpush.msra.mxu0 %v304
  %372 = vmatpush.msra.mxu0 %v300
  %373 = vmatpush.msra.mxu0 %v296
  %374 = vmatpush.msra.mxu0 %v292
  %375 = vmatpush.msra.mxu0 %v288
  %376 = vmatpush.msra.mxu0 %v284
  %377 = vmatpush.msra.mxu0 %v280
  %378 = vmatpush.msra.mxu0 %v276
  %379 = vmatpush.msra.mxu0 %v272
  %380 = vmatpush.msra.mxu0 %v268
  %381 = vmatpush.msra.mxu0 %v264
  %382 = vmatpush.msra.mxu0 %v260
  %383 = vmatpush.msra.mxu0 %v256
  %384 = vmatpush.msra.mxu0 %v252
  %385 = vmatpush.msra.mxu0 %v248
  %386 = vmatmul.f32.gmra.mxu0 0.0
  %v387 = vpop.f32.mrf.mxu0
  %v388 = vadd.f32 0.0, %v387
  %389 = vdwg.mxu0
  %v394 = vrot.slane %v348, 6
  %v395 = vrot.slane %v368, 4
  %v396 = vrot.slane %v388, 2
  %v397 = vsel %vm193, %v328, %v394
  %v398 = vsel %vm195, %v395, %v396
  %v399 = vsel %vm197, %v397, %v398
  %v401 = vadd.f32 %v309, %v399
  %v402 = vxor.u32 %v401, 2147483648
  %v403 = vmul.f32 %v402, 1.442695
  %v404 = vpow.pop %v403
  %v405 = vadd.f32 %v404, 1.0
  %v406 = vrcp.pop %v405
  %v407 = vmul.f32 %v405, %v406
  %v408 = vsub.f32 1.0, %v407
  %v409 = vmul.f32 %v406, %v408
  %v410 = vadd.f32 %v406, %v409
  %vm411 = vweird.f32 %v405
  %vm412 = vweird.f32 %v406
  %vm413 = vmor %vm411, %vm412
  %v414 = vsel %vm413, %v406, %v410
  %v415 = vand.u32 2147483647, %v405
  %vm416 = vcmp.eq.f32.partialorder %v415, 8.507059e+37
  %v417 = vand.u32 %v405, 2147483648
  %v418 = vor.u32 1.1754944e-38, %v417
  %v419 = vsel %vm416, %v418, %v414
  %v420 = vmul.f32 1.0, %v419
  %v422 = vrot.slane %v401, 2
  %v424 = vxor.u32 %v422, 2147483648
  %v425 = vmul.f32 %v424, 1.442695
  %v426 = vpow.pop %v425
  %v427 = vadd.f32 %v426, 1.0
  %v428 = vrcp.pop %v427
  %v429 = vmul.f32 %v427, %v428
  %v430 = vsub.f32 1.0, %v429
  %v431 = vmul.f32 %v428, %v430
  %v432 = vadd.f32 %v428, %v431
  %vm433 = vweird.f32 %v427
  %vm434 = vweird.f32 %v428
  %vm435 = vmor %vm433, %vm434
  %v436 = vsel %vm435, %v428, %v432
  %v437 = vand.u32 2147483647, %v427
  %vm438 = vcmp.eq.f32.partialorder %v437, 8.507059e+37
  %v439 = vand.u32 %v427, 2147483648
  %v440 = vor.u32 1.1754944e-38, %v439
  %v441 = vsel %vm438, %v440, %v436
  %v442 = vmul.f32 1.0, %v441
  %v443 = vrot.slane %v401, 4
  %v445 = vtanh.pop %v443
  %v446 = vrot.slane %v401, 6
  %v448 = vxor.u32 %v446, 2147483648
  %v449 = vmul.f32 %v448, 1.442695
  %v450 = vpow.pop %v449
  %v451 = vadd.f32 %v450, 1.0
  %v452 = vrcp.pop %v451
  %v453 = vmul.f32 %v451, %v452
  %v454 = vsub.f32 1.0, %v453
  %v455 = vmul.f32 %v452, %v454
  %v456 = vadd.f32 %v452, %v455
  %vm457 = vweird.f32 %v451
  %vm458 = vweird.f32 %v452
  %vm459 = vmor %vm457, %vm458
  %v460 = vsel %vm459, %v452, %v456
  %v461 = vand.u32 2147483647, %v451
  %vm462 = vcmp.eq.f32.partialorder %v461, 8.507059e+37
  %v463 = vand.u32 %v451, 2147483648
  %v464 = vor.u32 1.1754944e-38, %v463
  %v465 = vsel %vm462, %v464, %v460
  %v466 = vmul.f32 1.0, %v465
  %v467 = vmul.f32 %v442, 0.0
  %v468 = vmul.f32 %v420, %v445
  %v469 = vadd.f32 %v467, %v468
  %v470 = vtanh.pop %v469
  %v471 = vmul.f32 %v466, %v470
  %472 = vst [vmem:[#allocation3] sm:$0x3] %v471
  %s473 = scalar_lea.vmem [#allocation2], 8
  %v474 = vld [vmem:[%s473] sm:$0xff]
  %475 = vmatpush.msra.mxu0 %v305
  %476 = vmatpush.msra.mxu0 %v301
  %477 = vmatpush.msra.mxu0 %v297
  %478 = vmatpush.msra.mxu0 %v293
  %479 = vmatpush.msra.mxu0 %v289
  %480 = vmatpush.msra.mxu0 %v285
  %481 = vmatpush.msra.mxu0 %v281
  %482 = vmatpush.msra.mxu0 %v277
  %483 = vmatpush.msra.mxu0 %v273
  %484 = vmatpush.msra.mxu0 %v269
  %485 = vmatpush.msra.mxu0 %v265
  %486 = vmatpush.msra.mxu0 %v261
  %487 = vmatpush.msra.mxu0 %v257
  %488 = vmatpush.msra.mxu0 %v253
  %489 = vmatpush.msra.mxu0 %v249
  %490 = vmatpush.msra.mxu0 %v245
  %491 = vmatmul.f32.gmra.mxu0 %v471
  %v492 = vpop.f32.mrf.mxu0
  %v493 = vadd.f32 0.0, %v492
  %494 = vdwg.mxu0
  %495 = vmatpush.msra.mxu0 %v306
  %496 = vmatpush.msra.mxu0 %v302
  %497 = vmatpush.msra.mxu0 %v298
  %498 = vmatpush.msra.mxu0 %v294
  %499 = vmatpush.msra.mxu0 %v290
  %500 = vmatpush.msra.mxu0 %v286
  %501 = vmatpush.msra.mxu0 %v282
  %502 = vmatpush.msra.mxu0 %v278
  %503 = vmatpush.msra.mxu0 %v274
  %504 = vmatpush.msra.mxu0 %v270
  %505 = vmatpush.msra.mxu0 %v266
  %506 = vmatpush.msra.mxu0 %v262
  %507 = vmatpush.msra.mxu0 %v258
  %508 = vmatpush.msra.mxu0 %v254
  %509 = vmatpush.msra.mxu0 %v250
  %510 = vmatpush.msra.mxu0 %v246
  %511 = vmatmul.f32.gmra.mxu0 %v471
  %v512 = vpop.f32.mrf.mxu0
  %v513 = vadd.f32 0.0, %v512
  %514 = vdwg.mxu0
  %515 = vmatpush.msra.mxu0 %v307
  %516 = vmatpush.msra.mxu0 %v303
  %517 = vmatpush.msra.mxu0 %v299
  %518 = vmatpush.msra.mxu0 %v295
  %519 = vmatpush.msra.mxu0 %v291
  %520 = vmatpush.msra.mxu0 %v287
  %521 = vmatpush.msra.mxu0 %v283
  %522 = vmatpush.msra.mxu0 %v279
  %523 = vmatpush.msra.mxu0 %v275
  %524 = vmatpush.msra.mxu0 %v271
  %525 = vmatpush.msra.mxu0 %v267
  %526 = vmatpush.msra.mxu0 %v263
  %527 = vmatpush.msra.mxu0 %v259
  %528 = vmatpush.msra.mxu0 %v255
  %529 = vmatpush.msra.mxu0 %v251
  %530 = vmatpush.msra.mxu0 %v247
  %531 = vmatmul.f32.gmra.mxu0 %v471
  %v532 = vpop.f32.mrf.mxu0
  %v533 = vadd.f32 0.0, %v532
  %534 = vdwg.mxu0
  %535 = vmatpush.msra.mxu0 %v308
  %536 = vmatpush.msra.mxu0 %v304
  %537 = vmatpush.msra.mxu0 %v300
  %538 = vmatpush.msra.mxu0 %v296
  %539 = vmatpush.msra.mxu0 %v292
  %540 = vmatpush.msra.mxu0 %v288
  %541 = vmatpush.msra.mxu0 %v284
  %542 = vmatpush.msra.mxu0 %v280
  %543 = vmatpush.msra.mxu0 %v276
  %544 = vmatpush.msra.mxu0 %v272
  %545 = vmatpush.msra.mxu0 %v268
  %546 = vmatpush.msra.mxu0 %v264
  %547 = vmatpush.msra.mxu0 %v260
  %548 = vmatpush.msra.mxu0 %v256
  %549 = vmatpush.msra.mxu0 %v252
  %550 = vmatpush.msra.mxu0 %v248
  %551 = vmatmul.f32.gmra.mxu0 %v471
  %v552 = vpop.f32.mrf.mxu0
  %v553 = vadd.f32 0.0, %v552
  %554 = vdwg.mxu0
  %v559 = vrot.slane %v513, 6
  %v560 = vrot.slane %v533, 4
  %v561 = vrot.slane %v553, 2
  %v562 = vsel %vm193, %v493, %v559
  %v563 = vsel %vm195, %v560, %v561
  %v564 = vsel %vm197, %v562, %v563
  %v566 = vadd.f32 %v474, %v564
  %v567 = vxor.u32 %v566, 2147483648
  %v568 = vmul.f32 %v567, 1.442695
  %v569 = vpow.pop %v568
  %v570 = vadd.f32 %v569, 1.0
  %v571 = vrcp.pop %v570
  %v572 = vmul.f32 %v570, %v571
  %v573 = vsub.f32 1.0, %v572
  %v574 = vmul.f32 %v571, %v573
  %v575 = vadd.f32 %v571, %v574
  %vm576 = vweird.f32 %v570
  %vm577 = vweird.f32 %v571
  %vm578 = vmor %vm576, %vm577
  %v579 = vsel %vm578, %v571, %v575
  %v580 = vand.u32 2147483647, %v570
  %vm581 = vcmp.eq.f32.partialorder %v580, 8.507059e+37
  %v582 = vand.u32 %v570, 2147483648
  %v583 = vor.u32 1.1754944e-38, %v582
  %v584 = vsel %vm581, %v583, %v579
  %v585 = vmul.f32 1.0, %v584
  %v587 = vrot.slane %v566, 2
  %v589 = vxor.u32 %v587, 2147483648
  %v590 = vmul.f32 %v589, 1.442695
  %v591 = vpow.pop %v590
  %v592 = vadd.f32 %v591, 1.0
  %v593 = vrcp.pop %v592
  %v594 = vmul.f32 %v592, %v593
  %v595 = vsub.f32 1.0, %v594
  %v596 = vmul.f32 %v593, %v595
  %v597 = vadd.f32 %v593, %v596
  %vm598 = vweird.f32 %v592
  %vm599 = vweird.f32 %v593
  %vm600 = vmor %vm598, %vm599
  %v601 = vsel %vm600, %v593, %v597
  %v602 = vand.u32 2147483647, %v592
  %vm603 = vcmp.eq.f32.partialorder %v602, 8.507059e+37
  %v604 = vand.u32 %v592, 2147483648
  %v605 = vor.u32 1.1754944e-38, %v604
  %v606 = vsel %vm603, %v605, %v601
  %v607 = vmul.f32 1.0, %v606
  %v608 = vrot.slane %v566, 4
  %v610 = vtanh.pop %v608
  %v611 = vrot.slane %v566, 6
  %v613 = vxor.u32 %v611, 2147483648
  %v614 = vmul.f32 %v613, 1.442695
  %v615 = vpow.pop %v614
  %v616 = vadd.f32 %v615, 1.0
  %v617 = vrcp.pop %v616
  %v618 = vmul.f32 %v616, %v617
  %v619 = vsub.f32 1.0, %v618
  %v620 = vmul.f32 %v617, %v619
  %v621 = vadd.f32 %v617, %v620
  %vm622 = vweird.f32 %v616
  %vm623 = vweird.f32 %v617
  %vm624 = vmor %vm622, %vm623
  %v625 = vsel %vm624, %v617, %v621
  %v626 = vand.u32 2147483647, %v616
  %vm627 = vcmp.eq.f32.partialorder %v626, 8.507059e+37
  %v628 = vand.u32 %v616, 2147483648
  %v629 = vor.u32 1.1754944e-38, %v628
  %v630 = vsel %vm627, %v629, %v625
  %v631 = vmul.f32 1.0, %v630
  %v632 = vmul.f32 %v607, %v469
  %v633 = vmul.f32 %v585, %v610
  %v634 = vadd.f32 %v632, %v633
  %v635 = vtanh.pop %v634
  %v636 = vmul.f32 %v631, %v635
  %s637 = scalar_lea.vmem [#allocation3], 2
  %638 = vst [vmem:[%s637] sm:$0x3] %v636
  %s639 = scalar_lea.vmem [#allocation2], 16
  %v640 = vld [vmem:[%s639] sm:$0xff]
  %641 = vmatpush.msra.mxu0 %v305
  %642 = vmatpush.msra.mxu0 %v301
  %643 = vmatpush.msra.mxu0 %v297
  %644 = vmatpush.msra.mxu0 %v293
  %645 = vmatpush.msra.mxu0 %v289
  %646 = vmatpush.msra.mxu0 %v285
  %647 = vmatpush.msra.mxu0 %v281
  %648 = vmatpush.msra.mxu0 %v277
  %649 = vmatpush.msra.mxu0 %v273
  %650 = vmatpush.msra.mxu0 %v269
  %651 = vmatpush.msra.mxu0 %v265
  %652 = vmatpush.msra.mxu0 %v261
  %653 = vmatpush.msra.mxu0 %v257
  %654 = vmatpush.msra.mxu0 %v253
  %655 = vmatpush.msra.mxu0 %v249
  %656 = vmatpush.msra.mxu0 %v245
  %657 = vmatmul.f32.gmra.mxu0 %v636
  %v658 = vpop.f32.mrf.mxu0
  %v659 = vadd.f32 0.0, %v658
  %660 = vdwg.mxu0
  %661 = vmatpush.msra.mxu0 %v306
  %662 = vmatpush.msra.mxu0 %v302
  %663 = vmatpush.msra.mxu0 %v298
  %664 = vmatpush.msra.mxu0 %v294
  %665 = vmatpush.msra.mxu0 %v290
  %666 = vmatpush.msra.mxu0 %v286
  %667 = vmatpush.msra.mxu0 %v282
  %668 = vmatpush.msra.mxu0 %v278
  %669 = vmatpush.msra.mxu0 %v274
  %670 = vmatpush.msra.mxu0 %v270
  %671 = vmatpush.msra.mxu0 %v266
  %672 = vmatpush.msra.mxu0 %v262
  %673 = vmatpush.msra.mxu0 %v258
  %674 = vmatpush.msra.mxu0 %v254
  %675 = vmatpush.msra.mxu0 %v250
  %676 = vmatpush.msra.mxu0 %v246
  %677 = vmatmul.f32.gmra.mxu0 %v636
  %v678 = vpop.f32.mrf.mxu0
  %v679 = vadd.f32 0.0, %v678
  %680 = vdwg.mxu0
  %681 = vmatpush.msra.mxu0 %v307
  %682 = vmatpush.msra.mxu0 %v303
  %683 = vmatpush.msra.mxu0 %v299
  %684 = vmatpush.msra.mxu0 %v295
  %685 = vmatpush.msra.mxu0 %v291
  %686 = vmatpush.msra.mxu0 %v287
  %687 = vmatpush.msra.mxu0 %v283
  %688 = vmatpush.msra.mxu0 %v279
  %689 = vmatpush.msra.mxu0 %v275
  %690 = vmatpush.msra.mxu0 %v271
  %691 = vmatpush.msra.mxu0 %v267
  %692 = vmatpush.msra.mxu0 %v263
  %693 = vmatpush.msra.mxu0 %v259
  %694 = vmatpush.msra.mxu0 %v255
  %695 = vmatpush.msra.mxu0 %v251
  %696 = vmatpush.msra.mxu0 %v247
  %697 = vmatmul.f32.gmra.mxu0 %v636
  %v698 = vpop.f32.mrf.mxu0
  %v699 = vadd.f32 0.0, %v698
  %700 = vdwg.mxu0
  %701 = vmatpush.msra.mxu0 %v308
  %702 = vmatpush.msra.mxu0 %v304
  %703 = vmatpush.msra.mxu0 %v300
  %704 = vmatpush.msra.mxu0 %v296
  %705 = vmatpush.msra.mxu0 %v292
  %706 = vmatpush.msra.mxu0 %v288
  %707 = vmatpush.msra.mxu0 %v284
  %708 = vmatpush.msra.mxu0 %v280
  %709 = vmatpush.msra.mxu0 %v276
  %710 = vmatpush.msra.mxu0 %v272
  %711 = vmatpush.msra.mxu0 %v268
  %712 = vmatpush.msra.mxu0 %v264
  %713 = vmatpush.msra.mxu0 %v260
  %714 = vmatpush.msra.mxu0 %v256
  %715 = vmatpush.msra.mxu0 %v252
  %716 = vmatpush.msra.mxu0 %v248
  %717 = vmatmul.f32.gmra.mxu0 %v636
  %v718 = vpop.f32.mrf.mxu0
  %v719 = vadd.f32 0.0, %v718
  %720 = vdwg.mxu0
  %v725 = vrot.slane %v679, 6
  %v726 = vrot.slane %v699, 4
  %v727 = vrot.slane %v719, 2
  %v728 = vsel %vm193, %v659, %v725
  %v729 = vsel %vm195, %v726, %v727
  %v730 = vsel %vm197, %v728, %v729
  %v732 = vadd.f32 %v640, %v730
  %v733 = vxor.u32 %v732, 2147483648
  %v734 = vmul.f32 %v733, 1.442695
  %v735 = vpow.pop %v734
  %v736 = vadd.f32 %v735, 1.0
  %v737 = vrcp.pop %v736
  %v738 = vmul.f32 %v736, %v737
  %v739 = vsub.f32 1.0, %v738
  %v740 = vmul.f32 %v737, %v739
  %v741 = vadd.f32 %v737, %v740
  %vm742 = vweird.f32 %v736
  %vm743 = vweird.f32 %v737
  %vm744 = vmor %vm742, %vm743
  %v745 = vsel %vm744, %v737, %v741
  %v746 = vand.u32 2147483647, %v736
  %vm747 = vcmp.eq.f32.partialorder %v746, 8.507059e+37
  %v748 = vand.u32 %v736, 2147483648
  %v749 = vor.u32 1.1754944e-38, %v748
  %v750 = vsel %vm747, %v749, %v745
  %v751 = vmul.f32 1.0, %v750
  %v753 = vrot.slane %v732, 2
  %v755 = vxor.u32 %v753, 2147483648
  %v756 = vmul.f32 %v755, 1.442695
  %v757 = vpow.pop %v756
  %v758 = vadd.f32 %v757, 1.0
  %v759 = vrcp.pop %v758
  %v760 = vmul.f32 %v758, %v759
  %v761 = vsub.f32 1.0, %v760
  %v762 = vmul.f32 %v759, %v761
  %v763 = vadd.f32 %v759, %v762
  %vm764 = vweird.f32 %v758
  %vm765 = vweird.f32 %v759
  %vm766 = vmor %vm764, %vm765
  %v767 = vsel %vm766, %v759, %v763
  %v768 = vand.u32 2147483647, %v758
  %vm769 = vcmp.eq.f32.partialorder %v768, 8.507059e+37
  %v770 = vand.u32 %v758, 2147483648
  %v771 = vor.u32 1.1754944e-38, %v770
  %v772 = vsel %vm769, %v771, %v767
  %v773 = vmul.f32 1.0, %v772
  %v774 = vrot.slane %v732, 4
  %v776 = vtanh.pop %v774
  %v777 = vrot.slane %v732, 6
  %v779 = vxor.u32 %v777, 2147483648
  %v780 = vmul.f32 %v779, 1.442695
  %v781 = vpow.pop %v780
  %v782 = vadd.f32 %v781, 1.0
  %v783 = vrcp.pop %v782
  %v784 = vmul.f32 %v782, %v783
  %v785 = vsub.f32 1.0, %v784
  %v786 = vmul.f32 %v783, %v785
  %v787 = vadd.f32 %v783, %v786
  %vm788 = vweird.f32 %v782
  %vm789 = vweird.f32 %v783
  %vm790 = vmor %vm788, %vm789
  %v791 = vsel %vm790, %v783, %v787
  %v792 = vand.u32 2147483647, %v782
  %vm793 = vcmp.eq.f32.partialorder %v792, 8.507059e+37
  %v794 = vand.u32 %v782, 2147483648
  %v795 = vor.u32 1.1754944e-38, %v794
  %v796 = vsel %vm793, %v795, %v791
  %v797 = vmul.f32 1.0, %v796
  %v798 = vmul.f32 %v773, %v634
  %v799 = vmul.f32 %v751, %v776
  %v800 = vadd.f32 %v798, %v799
  %v801 = vtanh.pop %v800
  %v802 = vmul.f32 %v797, %v801
  %s803 = scalar_lea.vmem [#allocation3], 4
  %804 = vst [vmem:[%s803] sm:$0x3] %v802
  %s805 = scalar_lea.vmem [#allocation2], 24
  %v806 = vld [vmem:[%s805] sm:$0xff]
  %807 = vmatpush.msra.mxu0 %v305
  %808 = vmatpush.msra.mxu0 %v301
  %809 = vmatpush.msra.mxu0 %v297
  %810 = vmatpush.msra.mxu0 %v293
  %811 = vmatpush.msra.mxu0 %v289
  %812 = vmatpush.msra.mxu0 %v285
  %813 = vmatpush.msra.mxu0 %v281
  %814 = vmatpush.msra.mxu0 %v277
  %815 = vmatpush.msra.mxu0 %v273
  %816 = vmatpush.msra.mxu0 %v269
  %817 = vmatpush.msra.mxu0 %v265
  %818 = vmatpush.msra.mxu0 %v261
  %819 = vmatpush.msra.mxu0 %v257
  %820 = vmatpush.msra.mxu0 %v253
  %821 = vmatpush.msra.mxu0 %v249
  %822 = vmatpush.msra.mxu0 %v245
  %823 = vmatmul.f32.gmra.mxu0 %v802
  %v824 = vpop.f32.mrf.mxu0
  %v825 = vadd.f32 0.0, %v824
  %826 = vdwg.mxu0
  %827 = vmatpush.msra.mxu0 %v306
  %828 = vmatpush.msra.mxu0 %v302
  %829 = vmatpush.msra.mxu0 %v298
  %830 = vmatpush.msra.mxu0 %v294
  %831 = vmatpush.msra.mxu0 %v290
  %832 = vmatpush.msra.mxu0 %v286
  %833 = vmatpush.msra.mxu0 %v282
  %834 = vmatpush.msra.mxu0 %v278
  %835 = vmatpush.msra.mxu0 %v274
  %836 = vmatpush.msra.mxu0 %v270
  %837 = vmatpush.msra.mxu0 %v266
  %838 = vmatpush.msra.mxu0 %v262
  %839 = vmatpush.msra.mxu0 %v258
  %840 = vmatpush.msra.mxu0 %v254
  %841 = vmatpush.msra.mxu0 %v250
  %842 = vmatpush.msra.mxu0 %v246
  %843 = vmatmul.f32.gmra.mxu0 %v802
  %v844 = vpop.f32.mrf.mxu0
  %v845 = vadd.f32 0.0, %v844
  %846 = vdwg.mxu0
  %847 = vmatpush.msra.mxu0 %v307
  %848 = vmatpush.msra.mxu0 %v303
  %849 = vmatpush.msra.mxu0 %v299
  %850 = vmatpush.msra.mxu0 %v295
  %851 = vmatpush.msra.mxu0 %v291
  %852 = vmatpush.msra.mxu0 %v287
  %853 = vmatpush.msra.mxu0 %v283
  %854 = vmatpush.msra.mxu0 %v279
  %855 = vmatpush.msra.mxu0 %v275
  %856 = vmatpush.msra.mxu0 %v271
  %857 = vmatpush.msra.mxu0 %v267
  %858 = vmatpush.msra.mxu0 %v263
  %859 = vmatpush.msra.mxu0 %v259
  %860 = vmatpush.msra.mxu0 %v255
  %861 = vmatpush.msra.mxu0 %v251
  %862 = vmatpush.msra.mxu0 %v247
  %863 = vmatmul.f32.gmra.mxu0 %v802
  %v864 = vpop.f32.mrf.mxu0
  %v865 = vadd.f32 0.0, %v864
  %866 = vdwg.mxu0
  %867 = vmatpush.msra.mxu0 %v308
  %868 = vmatpush.msra.mxu0 %v304
  %869 = vmatpush.msra.mxu0 %v300
  %870 = vmatpush.msra.mxu0 %v296
  %871 = vmatpush.msra.mxu0 %v292
  %872 = vmatpush.msra.mxu0 %v288
  %873 = vmatpush.msra.mxu0 %v284
  %874 = vmatpush.msra.mxu0 %v280
  %875 = vmatpush.msra.mxu0 %v276
  %876 = vmatpush.msra.mxu0 %v272
  %877 = vmatpush.msra.mxu0 %v268
  %878 = vmatpush.msra.mxu0 %v264
  %879 = vmatpush.msra.mxu0 %v260
  %880 = vmatpush.msra.mxu0 %v256
  %881 = vmatpush.msra.mxu0 %v252
  %882 = vmatpush.msra.mxu0 %v248
  %883 = vmatmul.f32.gmra.mxu0 %v802
  %v884 = vpop.f32.mrf.mxu0
  %v885 = vadd.f32 0.0, %v884
  %886 = vdwg.mxu0
  %v891 = vrot.slane %v845, 6
  %v892 = vrot.slane %v865, 4
  %v893 = vrot.slane %v885, 2
  %v894 = vsel %vm193, %v825, %v891
  %v895 = vsel %vm195, %v892, %v893
  %v896 = vsel %vm197, %v894, %v895
  %v898 = vadd.f32 %v806, %v896
  %v899 = vxor.u32 %v898, 2147483648
  %v900 = vmul.f32 %v899, 1.442695
  %v901 = vpow.pop %v900
  %v902 = vadd.f32 %v901, 1.0
  %v903 = vrcp.pop %v902
  %v904 = vmul.f32 %v902, %v903
  %v905 = vsub.f32 1.0, %v904
  %v906 = vmul.f32 %v903, %v905
  %v907 = vadd.f32 %v903, %v906
  %vm908 = vweird.f32 %v902
  %vm909 = vweird.f32 %v903
  %vm910 = vmor %vm908, %vm909
  %v911 = vsel %vm910, %v903, %v907
  %v912 = vand.u32 2147483647, %v902
  %vm913 = vcmp.eq.f32.partialorder %v912, 8.507059e+37
  %v914 = vand.u32 %v902, 2147483648
  %v915 = vor.u32 1.1754944e-38, %v914
  %v916 = vsel %vm913, %v915, %v911
  %v917 = vmul.f32 1.0, %v916
  %v919 = vrot.slane %v898, 2
  %v921 = vxor.u32 %v919, 2147483648
  %v922 = vmul.f32 %v921, 1.442695
  %v923 = vpow.pop %v922
  %v924 = vadd.f32 %v923, 1.0
  %v925 = vrcp.pop %v924
  %v926 = vmul.f32 %v924, %v925
  %v927 = vsub.f32 1.0, %v926
  %v928 = vmul.f32 %v925, %v927
  %v929 = vadd.f32 %v925, %v928
  %vm930 = vweird.f32 %v924
  %vm931 = vweird.f32 %v925
  %vm932 = vmor %vm930, %vm931
  %v933 = vsel %vm932, %v925, %v929
  %v934 = vand.u32 2147483647, %v924
  %vm935 = vcmp.eq.f32.partialorder %v934, 8.507059e+37
  %v936 = vand.u32 %v924, 2147483648
  %v937 = vor.u32 1.1754944e-38, %v936
  %v938 = vsel %vm935, %v937, %v933
  %v939 = vmul.f32 1.0, %v938
  %v940 = vrot.slane %v898, 4
  %v942 = vtanh.pop %v940
  %v943 = vrot.slane %v898, 6
  %v945 = vxor.u32 %v943, 2147483648
  %v946 = vmul.f32 %v945, 1.442695
  %v947 = vpow.pop %v946
  %v948 = vadd.f32 %v947, 1.0
  %v949 = vrcp.pop %v948
  %v950 = vmul.f32 %v948, %v949
  %v951 = vsub.f32 1.0, %v950
  %v952 = vmul.f32 %v949, %v951
  %v953 = vadd.f32 %v949, %v952
  %vm954 = vweird.f32 %v948
  %vm955 = vweird.f32 %v949
  %vm956 = vmor %vm954, %vm955
  %v957 = vsel %vm956, %v949, %v953
  %v958 = vand.u32 2147483647, %v948
  %vm959 = vcmp.eq.f32.partialorder %v958, 8.507059e+37
  %v960 = vand.u32 %v948, 2147483648
  %v961 = vor.u32 1.1754944e-38, %v960
  %v962 = vsel %vm959, %v961, %v957
  %v963 = vmul.f32 1.0, %v962
  %v964 = vmul.f32 %v939, %v800
  %v965 = vmul.f32 %v917, %v942
  %v966 = vadd.f32 %v964, %v965
  %v967 = vtanh.pop %v966
  %v968 = vmul.f32 %v963, %v967
  %s969 = scalar_lea.vmem [#allocation3], 6
  %970 = vst [vmem:[%s969] sm:$0x3] %v968
  %s971 = scalar_lea.vmem [#allocation2], 32
  %v972 = vld [vmem:[%s971] sm:$0xff]
  %973 = vmatpush.msra.mxu0 %v305
  %974 = vmatpush.msra.mxu0 %v301
  %975 = vmatpush.msra.mxu0 %v297
  %976 = vmatpush.msra.mxu0 %v293
  %977 = vmatpush.msra.mxu0 %v289
  %978 = vmatpush.msra.mxu0 %v285
  %979 = vmatpush.msra.mxu0 %v281
  %980 = vmatpush.msra.mxu0 %v277
  %981 = vmatpush.msra.mxu0 %v273
  %982 = vmatpush.msra.mxu0 %v269
  %983 = vmatpush.msra.mxu0 %v265
  %984 = vmatpush.msra.mxu0 %v261
  %985 = vmatpush.msra.mxu0 %v257
  %986 = vmatpush.msra.mxu0 %v253
  %987 = vmatpush.msra.mxu0 %v249
  %988 = vmatpush.msra.mxu0 %v245
  %989 = vmatmul.f32.gmra.mxu0 %v968
  %v990 = vpop.f32.mrf.mxu0
  %v991 = vadd.f32 0.0, %v990
  %992 = vdwg.mxu0
  %993 = vmatpush.msra.mxu0 %v306
  %994 = vmatpush.msra.mxu0 %v302
  %995 = vmatpush.msra.mxu0 %v298
  %996 = vmatpush.msra.mxu0 %v294
  %997 = vmatpush.msra.mxu0 %v290
  %998 = vmatpush.msra.mxu0 %v286
  %999 = vmatpush.msra.mxu0 %v282
  %1000 = vmatpush.msra.mxu0 %v278
  %1001 = vmatpush.msra.mxu0 %v274
  %1002 = vmatpush.msra.mxu0 %v270
  %1003 = vmatpush.msra.mxu0 %v266
  %1004 = vmatpush.msra.mxu0 %v262
  %1005 = vmatpush.msra.mxu0 %v258
  %1006 = vmatpush.msra.mxu0 %v254
  %1007 = vmatpush.msra.mxu0 %v250
  %1008 = vmatpush.msra.mxu0 %v246
  %1009 = vmatmul.f32.gmra.mxu0 %v968
  %v1010 = vpop.f32.mrf.mxu0
  %v1011 = vadd.f32 0.0, %v1010
  %1012 = vdwg.mxu0
  %1013 = vmatpush.msra.mxu0 %v307
  %1014 = vmatpush.msra.mxu0 %v303
  %1015 = vmatpush.msra.mxu0 %v299
  %1016 = vmatpush.msra.mxu0 %v295
  %1017 = vmatpush.msra.mxu0 %v291
  %1018 = vmatpush.msra.mxu0 %v287
  %1019 = vmatpush.msra.mxu0 %v283
  %1020 = vmatpush.msra.mxu0 %v279
  %1021 = vmatpush.msra.mxu0 %v275
  %1022 = vmatpush.msra.mxu0 %v271
  %1023 = vmatpush.msra.mxu0 %v267
  %1024 = vmatpush.msra.mxu0 %v263
  %1025 = vmatpush.msra.mxu0 %v259
  %1026 = vmatpush.msra.mxu0 %v255
  %1027 = vmatpush.msra.mxu0 %v251
  %1028 = vmatpush.msra.mxu0 %v247
  %1029 = vmatmul.f32.gmra.mxu0 %v968
  %v1030 = vpop.f32.mrf.mxu0
  %v1031 = vadd.f32 0.0, %v1030
  %1032 = vdwg.mxu0
  %1033 = vmatpush.msra.mxu0 %v308
  %1034 = vmatpush.msra.mxu0 %v304
  %1035 = vmatpush.msra.mxu0 %v300
  %1036 = vmatpush.msra.mxu0 %v296
  %1037 = vmatpush.msra.mxu0 %v292
  %1038 = vmatpush.msra.mxu0 %v288
  %1039 = vmatpush.msra.mxu0 %v284
  %1040 = vmatpush.msra.mxu0 %v280
  %1041 = vmatpush.msra.mxu0 %v276
  %1042 = vmatpush.msra.mxu0 %v272
  %1043 = vmatpush.msra.mxu0 %v268
  %1044 = vmatpush.msra.mxu0 %v264
  %1045 = vmatpush.msra.mxu0 %v260
  %1046 = vmatpush.msra.mxu0 %v256
  %1047 = vmatpush.msra.mxu0 %v252
  %1048 = vmatpush.msra.mxu0 %v248
  %1049 = vmatmul.f32.gmra.mxu0 %v968
  %v1050 = vpop.f32.mrf.mxu0
  %v1051 = vadd.f32 0.0, %v1050
  %1052 = vdwg.mxu0
  %v1057 = vrot.slane %v1011, 6
  %v1058 = vrot.slane %v1031, 4
  %v1059 = vrot.slane %v1051, 2
  %v1060 = vsel %vm193, %v991, %v1057
  %v1061 = vsel %vm195, %v1058, %v1059
  %v1062 = vsel %vm197, %v1060, %v1061
  %v1064 = vadd.f32 %v972, %v1062
  %v1065 = vxor.u32 %v1064, 2147483648
  %v1066 = vmul.f32 %v1065, 1.442695
  %v1067 = vpow.pop %v1066
  %v1068 = vadd.f32 %v1067, 1.0
  %v1069 = vrcp.pop %v1068
  %v1070 = vmul.f32 %v1068, %v1069
  %v1071 = vsub.f32 1.0, %v1070
  %v1072 = vmul.f32 %v1069, %v1071
  %v1073 = vadd.f32 %v1069, %v1072
  %vm1074 = vweird.f32 %v1068
  %vm1075 = vweird.f32 %v1069
  %vm1076 = vmor %vm1074, %vm1075
  %v1077 = vsel %vm1076, %v1069, %v1073
  %v1078 = vand.u32 2147483647, %v1068
  %vm1079 = vcmp.eq.f32.partialorder %v1078, 8.507059e+37
  %v1080 = vand.u32 %v1068, 2147483648
  %v1081 = vor.u32 1.1754944e-38, %v1080
  %v1082 = vsel %vm1079, %v1081, %v1077
  %v1083 = vmul.f32 1.0, %v1082
  %v1085 = vrot.slane %v1064, 2
  %v1087 = vxor.u32 %v1085, 2147483648
  %v1088 = vmul.f32 %v1087, 1.442695
  %v1089 = vpow.pop %v1088
  %v1090 = vadd.f32 %v1089, 1.0
  %v1091 = vrcp.pop %v1090
  %v1092 = vmul.f32 %v1090, %v1091
  %v1093 = vsub.f32 1.0, %v1092
  %v1094 = vmul.f32 %v1091, %v1093
  %v1095 = vadd.f32 %v1091, %v1094
  %vm1096 = vweird.f32 %v1090
  %vm1097 = vweird.f32 %v1091
  %vm1098 = vmor %vm1096, %vm1097
  %v1099 = vsel %vm1098, %v1091, %v1095
  %v1100 = vand.u32 2147483647, %v1090
  %vm1101 = vcmp.eq.f32.partialorder %v1100, 8.507059e+37
  %v1102 = vand.u32 %v1090, 2147483648
  %v1103 = vor.u32 1.1754944e-38, %v1102
  %v1104 = vsel %vm1101, %v1103, %v1099
  %v1105 = vmul.f32 1.0, %v1104
  %v1106 = vrot.slane %v1064, 4
  %v1108 = vtanh.pop %v1106
  %v1109 = vrot.slane %v1064, 6
  %v1111 = vxor.u32 %v1109, 2147483648
  %v1112 = vmul.f32 %v1111, 1.442695
  %v1113 = vpow.pop %v1112
  %v1114 = vadd.f32 %v1113, 1.0
  %v1115 = vrcp.pop %v1114
  %v1116 = vmul.f32 %v1114, %v1115
  %v1117 = vsub.f32 1.0, %v1116
  %v1118 = vmul.f32 %v1115, %v1117
  %v1119 = vadd.f32 %v1115, %v1118
  %vm1120 = vweird.f32 %v1114
  %vm1121 = vweird.f32 %v1115
  %vm1122 = vmor %vm1120, %vm1121
  %v1123 = vsel %vm1122, %v1115, %v1119
  %v1124 = vand.u32 2147483647, %v1114
  %vm1125 = vcmp.eq.f32.partialorder %v1124, 8.507059e+37
  %v1126 = vand.u32 %v1114, 2147483648
  %v1127 = vor.u32 1.1754944e-38, %v1126
  %v1128 = vsel %vm1125, %v1127, %v1123
  %v1129 = vmul.f32 1.0, %v1128
  %v1130 = vmul.f32 %v1105, %v966
  %v1131 = vmul.f32 %v1083, %v1108
  %v1132 = vadd.f32 %v1130, %v1131
  %v1133 = vtanh.pop %v1132
  %v1134 = vmul.f32 %v1129, %v1133
  %s1135 = scalar_lea.vmem [#allocation3], 8
  %1136 = vst [vmem:[%s1135] sm:$0x3] %v1134
  %s1137 = scalar_lea.vmem [#allocation2], 40
  %v1138 = vld [vmem:[%s1137] sm:$0xff]
  %1139 = vmatpush.msra.mxu0 %v305
  %1140 = vmatpush.msra.mxu0 %v301
  %1141 = vmatpush.msra.mxu0 %v297
  %1142 = vmatpush.msra.mxu0 %v293
  %1143 = vmatpush.msra.mxu0 %v289
  %1144 = vmatpush.msra.mxu0 %v285
  %1145 = vmatpush.msra.mxu0 %v281
  %1146 = vmatpush.msra.mxu0 %v277
  %1147 = vmatpush.msra.mxu0 %v273
  %1148 = vmatpush.msra.mxu0 %v269
  %1149 = vmatpush.msra.mxu0 %v265
  %1150 = vmatpush.msra.mxu0 %v261
  %1151 = vmatpush.msra.mxu0 %v257
  %1152 = vmatpush.msra.mxu0 %v253
  %1153 = vmatpush.msra.mxu0 %v249
  %1154 = vmatpush.msra.mxu0 %v245
  %1155 = vmatmul.f32.gmra.mxu0 %v1134
  %v1156 = vpop.f32.mrf.mxu0
  %v1157 = vadd.f32 0.0, %v1156
  %1158 = vdwg.mxu0
  %1159 = vmatpush.msra.mxu0 %v306
  %1160 = vmatpush.msra.mxu0 %v302
  %1161 = vmatpush.msra.mxu0 %v298
  %1162 = vmatpush.msra.mxu0 %v294
  %1163 = vmatpush.msra.mxu0 %v290
  %1164 = vmatpush.msra.mxu0 %v286
  %1165 = vmatpush.msra.mxu0 %v282
  %1166 = vmatpush.msra.mxu0 %v278
  %1167 = vmatpush.msra.mxu0 %v274
  %1168 = vmatpush.msra.mxu0 %v270
  %1169 = vmatpush.msra.mxu0 %v266
  %1170 = vmatpush.msra.mxu0 %v262
  %1171 = vmatpush.msra.mxu0 %v258
  %1172 = vmatpush.msra.mxu0 %v254
  %1173 = vmatpush.msra.mxu0 %v250
  %1174 = vmatpush.msra.mxu0 %v246
  %1175 = vmatmul.f32.gmra.mxu0 %v1134
  %v1176 = vpop.f32.mrf.mxu0
  %v1177 = vadd.f32 0.0, %v1176
  %1178 = vdwg.mxu0
  %1179 = vmatpush.msra.mxu0 %v307
  %1180 = vmatpush.msra.mxu0 %v303
  %1181 = vmatpush.msra.mxu0 %v299
  %1182 = vmatpush.msra.mxu0 %v295
  %1183 = vmatpush.msra.mxu0 %v291
  %1184 = vmatpush.msra.mxu0 %v287
  %1185 = vmatpush.msra.mxu0 %v283
  %1186 = vmatpush.msra.mxu0 %v279
  %1187 = vmatpush.msra.mxu0 %v275
  %1188 = vmatpush.msra.mxu0 %v271
  %1189 = vmatpush.msra.mxu0 %v267
  %1190 = vmatpush.msra.mxu0 %v263
  %1191 = vmatpush.msra.mxu0 %v259
  %1192 = vmatpush.msra.mxu0 %v255
  %1193 = vmatpush.msra.mxu0 %v251
  %1194 = vmatpush.msra.mxu0 %v247
  %1195 = vmatmul.f32.gmra.mxu0 %v1134
  %v1196 = vpop.f32.mrf.mxu0
  %v1197 = vadd.f32 0.0, %v1196
  %1198 = vdwg.mxu0
  %1199 = vmatpush.msra.mxu0 %v308
  %1200 = vmatpush.msra.mxu0 %v304
  %1201 = vmatpush.msra.mxu0 %v300
  %1202 = vmatpush.msra.mxu0 %v296
  %1203 = vmatpush.msra.mxu0 %v292
  %1204 = vmatpush.msra.mxu0 %v288
  %1205 = vmatpush.msra.mxu0 %v284
  %1206 = vmatpush.msra.mxu0 %v280
  %1207 = vmatpush.msra.mxu0 %v276
  %1208 = vmatpush.msra.mxu0 %v272
  %1209 = vmatpush.msra.mxu0 %v268
  %1210 = vmatpush.msra.mxu0 %v264
  %1211 = vmatpush.msra.mxu0 %v260
  %1212 = vmatpush.msra.mxu0 %v256
  %1213 = vmatpush.msra.mxu0 %v252
  %1214 = vmatpush.msra.mxu0 %v248
  %1215 = vmatmul.f32.gmra.mxu0 %v1134
  %v1216 = vpop.f32.mrf.mxu0
  %v1217 = vadd.f32 0.0, %v1216
  %1218 = vdwg.mxu0
  %v1223 = vrot.slane %v1177, 6
  %v1224 = vrot.slane %v1197, 4
  %v1225 = vrot.slane %v1217, 2
  %v1226 = vsel %vm193, %v1157, %v1223
  %v1227 = vsel %vm195, %v1224, %v1225
  %v1228 = vsel %vm197, %v1226, %v1227
  %v1230 = vadd.f32 %v1138, %v1228
  %v1231 = vxor.u32 %v1230, 2147483648
  %v1232 = vmul.f32 %v1231, 1.442695
  %v1233 = vpow.pop %v1232
  %v1234 = vadd.f32 %v1233, 1.0
  %v1235 = vrcp.pop %v1234
  %v1236 = vmul.f32 %v1234, %v1235
  %v1237 = vsub.f32 1.0, %v1236
  %v1238 = vmul.f32 %v1235, %v1237
  %v1239 = vadd.f32 %v1235, %v1238
  %vm1240 = vweird.f32 %v1234
  %vm1241 = vweird.f32 %v1235
  %vm1242 = vmor %vm1240, %vm1241
  %v1243 = vsel %vm1242, %v1235, %v1239
  %v1244 = vand.u32 2147483647, %v1234
  %vm1245 = vcmp.eq.f32.partialorder %v1244, 8.507059e+37
  %v1246 = vand.u32 %v1234, 2147483648
  %v1247 = vor.u32 1.1754944e-38, %v1246
  %v1248 = vsel %vm1245, %v1247, %v1243
  %v1249 = vmul.f32 1.0, %v1248
  %v1251 = vrot.slane %v1230, 2
  %v1253 = vxor.u32 %v1251, 2147483648
  %v1254 = vmul.f32 %v1253, 1.442695
  %v1255 = vpow.pop %v1254
  %v1256 = vadd.f32 %v1255, 1.0
  %v1257 = vrcp.pop %v1256
  %v1258 = vmul.f32 %v1256, %v1257
  %v1259 = vsub.f32 1.0, %v1258
  %v1260 = vmul.f32 %v1257, %v1259
  %v1261 = vadd.f32 %v1257, %v1260
  %vm1262 = vweird.f32 %v1256
  %vm1263 = vweird.f32 %v1257
  %vm1264 = vmor %vm1262, %vm1263
  %v1265 = vsel %vm1264, %v1257, %v1261
  %v1266 = vand.u32 2147483647, %v1256
  %vm1267 = vcmp.eq.f32.partialorder %v1266, 8.507059e+37
  %v1268 = vand.u32 %v1256, 2147483648
  %v1269 = vor.u32 1.1754944e-38, %v1268
  %v1270 = vsel %vm1267, %v1269, %v1265
  %v1271 = vmul.f32 1.0, %v1270
  %v1272 = vrot.slane %v1230, 4
  %v1274 = vtanh.pop %v1272
  %v1275 = vrot.slane %v1230, 6
  %v1277 = vxor.u32 %v1275, 2147483648
  %v1278 = vmul.f32 %v1277, 1.442695
  %v1279 = vpow.pop %v1278
  %v1280 = vadd.f32 %v1279, 1.0
  %v1281 = vrcp.pop %v1280
  %v1282 = vmul.f32 %v1280, %v1281
  %v1283 = vsub.f32 1.0, %v1282
  %v1284 = vmul.f32 %v1281, %v1283
  %v1285 = vadd.f32 %v1281, %v1284
  %vm1286 = vweird.f32 %v1280
  %vm1287 = vweird.f32 %v1281
  %vm1288 = vmor %vm1286, %vm1287
  %v1289 = vsel %vm1288, %v1281, %v1285
  %v1290 = vand.u32 2147483647, %v1280
  %vm1291 = vcmp.eq.f32.partialorder %v1290, 8.507059e+37
  %v1292 = vand.u32 %v1280, 2147483648
  %v1293 = vor.u32 1.1754944e-38, %v1292
  %v1294 = vsel %vm1291, %v1293, %v1289
  %v1295 = vmul.f32 1.0, %v1294
  %v1296 = vmul.f32 %v1271, %v1132
  %v1297 = vmul.f32 %v1249, %v1274
  %v1298 = vadd.f32 %v1296, %v1297
  %v1299 = vtanh.pop %v1298
  %v1300 = vmul.f32 %v1295, %v1299
  %s1301 = scalar_lea.vmem [#allocation3], 10
  %1302 = vst [vmem:[%s1301] sm:$0x3] %v1300
  %s1303 = scalar_lea.vmem [#allocation2], 48
  %v1304 = vld [vmem:[%s1303] sm:$0xff]
  %1305 = vmatpush.msra.mxu0 %v305
  %1306 = vmatpush.msra.mxu0 %v301
  %1307 = vmatpush.msra.mxu0 %v297
  %1308 = vmatpush.msra.mxu0 %v293
  %1309 = vmatpush.msra.mxu0 %v289
  %1310 = vmatpush.msra.mxu0 %v285
  %1311 = vmatpush.msra.mxu0 %v281
  %1312 = vmatpush.msra.mxu0 %v277
  %1313 = vmatpush.msra.mxu0 %v273
  %1314 = vmatpush.msra.mxu0 %v269
  %1315 = vmatpush.msra.mxu0 %v265
  %1316 = vmatpush.msra.mxu0 %v261
  %1317 = vmatpush.msra.mxu0 %v257
  %1318 = vmatpush.msra.mxu0 %v253
  %1319 = vmatpush.msra.mxu0 %v249
  %1320 = vmatpush.msra.mxu0 %v245
  %1321 = vmatmul.f32.gmra.mxu0 %v1300
  %v1322 = vpop.f32.mrf.mxu0
  %v1323 = vadd.f32 0.0, %v1322
  %1324 = vdwg.mxu0
  %1325 = vmatpush.msra.mxu0 %v306
  %1326 = vmatpush.msra.mxu0 %v302
  %1327 = vmatpush.msra.mxu0 %v298
  %1328 = vmatpush.msra.mxu0 %v294
  %1329 = vmatpush.msra.mxu0 %v290
  %1330 = vmatpush.msra.mxu0 %v286
  %1331 = vmatpush.msra.mxu0 %v282
  %1332 = vmatpush.msra.mxu0 %v278
  %1333 = vmatpush.msra.mxu0 %v274
  %1334 = vmatpush.msra.mxu0 %v270
  %1335 = vmatpush.msra.mxu0 %v266
  %1336 = vmatpush.msra.mxu0 %v262
  %1337 = vmatpush.msra.mxu0 %v258
  %1338 = vmatpush.msra.mxu0 %v254
  %1339 = vmatpush.msra.mxu0 %v250
  %1340 = vmatpush.msra.mxu0 %v246
  %1341 = vmatmul.f32.gmra.mxu0 %v1300
  %v1342 = vpop.f32.mrf.mxu0
  %v1343 = vadd.f32 0.0, %v1342
  %1344 = vdwg.mxu0
  %1345 = vmatpush.msra.mxu0 %v307
  %1346 = vmatpush.msra.mxu0 %v303
  %1347 = vmatpush.msra.mxu0 %v299
  %1348 = vmatpush.msra.mxu0 %v295
  %1349 = vmatpush.msra.mxu0 %v291
  %1350 = vmatpush.msra.mxu0 %v287
  %1351 = vmatpush.msra.mxu0 %v283
  %1352 = vmatpush.msra.mxu0 %v279
  %1353 = vmatpush.msra.mxu0 %v275
  %1354 = vmatpush.msra.mxu0 %v271
  %1355 = vmatpush.msra.mxu0 %v267
  %1356 = vmatpush.msra.mxu0 %v263
  %1357 = vmatpush.msra.mxu0 %v259
  %1358 = vmatpush.msra.mxu0 %v255
  %1359 = vmatpush.msra.mxu0 %v251
  %1360 = vmatpush.msra.mxu0 %v247
  %1361 = vmatmul.f32.gmra.mxu0 %v1300
  %v1362 = vpop.f32.mrf.mxu0
  %v1363 = vadd.f32 0.0, %v1362
  %1364 = vdwg.mxu0
  %1365 = vmatpush.msra.mxu0 %v308
  %1366 = vmatpush.msra.mxu0 %v304
  %1367 = vmatpush.msra.mxu0 %v300
  %1368 = vmatpush.msra.mxu0 %v296
  %1369 = vmatpush.msra.mxu0 %v292
  %1370 = vmatpush.msra.mxu0 %v288
  %1371 = vmatpush.msra.mxu0 %v284
  %1372 = vmatpush.msra.mxu0 %v280
  %1373 = vmatpush.msra.mxu0 %v276
  %1374 = vmatpush.msra.mxu0 %v272
  %1375 = vmatpush.msra.mxu0 %v268
  %1376 = vmatpush.msra.mxu0 %v264
  %1377 = vmatpush.msra.mxu0 %v260
  %1378 = vmatpush.msra.mxu0 %v256
  %1379 = vmatpush.msra.mxu0 %v252
  %1380 = vmatpush.msra.mxu0 %v248
  %1381 = vmatmul.f32.gmra.mxu0 %v1300
  %v1382 = vpop.f32.mrf.mxu0
  %v1383 = vadd.f32 0.0, %v1382
  %1384 = vdwg.mxu0
  %v1389 = vrot.slane %v1343, 6
  %v1390 = vrot.slane %v1363, 4
  %v1391 = vrot.slane %v1383, 2
  %v1392 = vsel %vm193, %v1323, %v1389
  %v1393 = vsel %vm195, %v1390, %v1391
  %v1394 = vsel %vm197, %v1392, %v1393
  %v1396 = vadd.f32 %v1304, %v1394
  %v1397 = vxor.u32 %v1396, 2147483648
  %v1398 = vmul.f32 %v1397, 1.442695
  %v1399 = vpow.pop %v1398
  %v1400 = vadd.f32 %v1399, 1.0
  %v1401 = vrcp.pop %v1400
  %v1402 = vmul.f32 %v1400, %v1401
  %v1403 = vsub.f32 1.0, %v1402
  %v1404 = vmul.f32 %v1401, %v1403
  %v1405 = vadd.f32 %v1401, %v1404
  %vm1406 = vweird.f32 %v1400
  %vm1407 = vweird.f32 %v1401
  %vm1408 = vmor %vm1406, %vm1407
  %v1409 = vsel %vm1408, %v1401, %v1405
  %v1410 = vand.u32 2147483647, %v1400
  %vm1411 = vcmp.eq.f32.partialorder %v1410, 8.507059e+37
  %v1412 = vand.u32 %v1400, 2147483648
  %v1413 = vor.u32 1.1754944e-38, %v1412
  %v1414 = vsel %vm1411, %v1413, %v1409
  %v1415 = vmul.f32 1.0, %v1414
  %v1417 = vrot.slane %v1396, 2
  %v1419 = vxor.u32 %v1417, 2147483648
  %v1420 = vmul.f32 %v1419, 1.442695
  %v1421 = vpow.pop %v1420
  %v1422 = vadd.f32 %v1421, 1.0
  %v1423 = vrcp.pop %v1422
  %v1424 = vmul.f32 %v1422, %v1423
  %v1425 = vsub.f32 1.0, %v1424
  %v1426 = vmul.f32 %v1423, %v1425
  %v1427 = vadd.f32 %v1423, %v1426
  %vm1428 = vweird.f32 %v1422
  %vm1429 = vweird.f32 %v1423
  %vm1430 = vmor %vm1428, %vm1429
  %v1431 = vsel %vm1430, %v1423, %v1427
  %v1432 = vand.u32 2147483647, %v1422
  %vm1433 = vcmp.eq.f32.partialorder %v1432, 8.507059e+37
  %v1434 = vand.u32 %v1422, 2147483648
  %v1435 = vor.u32 1.1754944e-38, %v1434
  %v1436 = vsel %vm1433, %v1435, %v1431
  %v1437 = vmul.f32 1.0, %v1436
  %v1438 = vrot.slane %v1396, 4
  %v1440 = vtanh.pop %v1438
  %v1441 = vrot.slane %v1396, 6
  %v1443 = vxor.u32 %v1441, 2147483648
  %v1444 = vmul.f32 %v1443, 1.442695
  %v1445 = vpow.pop %v1444
  %v1446 = vadd.f32 %v1445, 1.0
  %v1447 = vrcp.pop %v1446
  %v1448 = vmul.f32 %v1446, %v1447
  %v1449 = vsub.f32 1.0, %v1448
  %v1450 = vmul.f32 %v1447, %v1449
  %v1451 = vadd.f32 %v1447, %v1450
  %vm1452 = vweird.f32 %v1446
  %vm1453 = vweird.f32 %v1447
  %vm1454 = vmor %vm1452, %vm1453
  %v1455 = vsel %vm1454, %v1447, %v1451
  %v1456 = vand.u32 2147483647, %v1446
  %vm1457 = vcmp.eq.f32.partialorder %v1456, 8.507059e+37
  %v1458 = vand.u32 %v1446, 2147483648
  %v1459 = vor.u32 1.1754944e-38, %v1458
  %v1460 = vsel %vm1457, %v1459, %v1455
  %v1461 = vmul.f32 1.0, %v1460
  %v1462 = vmul.f32 %v1437, %v1298
  %v1463 = vmul.f32 %v1415, %v1440
  %v1464 = vadd.f32 %v1462, %v1463
  %v1465 = vtanh.pop %v1464
  %v1466 = vmul.f32 %v1461, %v1465
  %s1467 = scalar_lea.vmem [#allocation3], 12
  %1468 = vst [vmem:[%s1467] sm:$0x3] %v1466
  %s1469 = scalar_lea.vmem [#allocation2], 56
  %v1470 = vld [vmem:[%s1469] sm:$0xff]
  %1471 = vmatpush.msra.mxu0 %v305
  %1472 = vmatpush.msra.mxu0 %v301
  %1473 = vmatpush.msra.mxu0 %v297
  %1474 = vmatpush.msra.mxu0 %v293
  %1475 = vmatpush.msra.mxu0 %v289
  %1476 = vmatpush.msra.mxu0 %v285
  %1477 = vmatpush.msra.mxu0 %v281
  %1478 = vmatpush.msra.mxu0 %v277
  %1479 = vmatpush.msra.mxu0 %v273
  %1480 = vmatpush.msra.mxu0 %v269
  %1481 = vmatpush.msra.mxu0 %v265
  %1482 = vmatpush.msra.mxu0 %v261
  %1483 = vmatpush.msra.mxu0 %v257
  %1484 = vmatpush.msra.mxu0 %v253
  %1485 = vmatpush.msra.mxu0 %v249
  %1486 = vmatpush.msra.mxu0 %v245
  %1487 = vmatmul.f32.gmra.mxu0 %v1466
  %v1488 = vpop.f32.mrf.mxu0
  %v1489 = vadd.f32 0.0, %v1488
  %1490 = vdwg.mxu0
  %1491 = vmatpush.msra.mxu0 %v306
  %1492 = vmatpush.msra.mxu0 %v302
  %1493 = vmatpush.msra.mxu0 %v298
  %1494 = vmatpush.msra.mxu0 %v294
  %1495 = vmatpush.msra.mxu0 %v290
  %1496 = vmatpush.msra.mxu0 %v286
  %1497 = vmatpush.msra.mxu0 %v282
  %1498 = vmatpush.msra.mxu0 %v278
  %1499 = vmatpush.msra.mxu0 %v274
  %1500 = vmatpush.msra.mxu0 %v270
  %1501 = vmatpush.msra.mxu0 %v266
  %1502 = vmatpush.msra.mxu0 %v262
  %1503 = vmatpush.msra.mxu0 %v258
  %1504 = vmatpush.msra.mxu0 %v254
  %1505 = vmatpush.msra.mxu0 %v250
  %1506 = vmatpush.msra.mxu0 %v246
  %1507 = vmatmul.f32.gmra.mxu0 %v1466
  %v1508 = vpop.f32.mrf.mxu0
  %v1509 = vadd.f32 0.0, %v1508
  %1510 = vdwg.mxu0
  %1511 = vmatpush.msra.mxu0 %v307
  %1512 = vmatpush.msra.mxu0 %v303
  %1513 = vmatpush.msra.mxu0 %v299
  %1514 = vmatpush.msra.mxu0 %v295
  %1515 = vmatpush.msra.mxu0 %v291
  %1516 = vmatpush.msra.mxu0 %v287
  %1517 = vmatpush.msra.mxu0 %v283
  %1518 = vmatpush.msra.mxu0 %v279
  %1519 = vmatpush.msra.mxu0 %v275
  %1520 = vmatpush.msra.mxu0 %v271
  %1521 = vmatpush.msra.mxu0 %v267
  %1522 = vmatpush.msra.mxu0 %v263
  %1523 = vmatpush.msra.mxu0 %v259
  %1524 = vmatpush.msra.mxu0 %v255
  %1525 = vmatpush.msra.mxu0 %v251
  %1526 = vmatpush.msra.mxu0 %v247
  %1527 = vmatmul.f32.gmra.mxu0 %v1466
  %v1528 = vpop.f32.mrf.mxu0
  %v1529 = vadd.f32 0.0, %v1528
  %1530 = vdwg.mxu0
  %1531 = vmatpush.msra.mxu0 %v308
  %1532 = vmatpush.msra.mxu0 %v304
  %1533 = vmatpush.msra.mxu0 %v300
  %1534 = vmatpush.msra.mxu0 %v296
  %1535 = vmatpush.msra.mxu0 %v292
  %1536 = vmatpush.msra.mxu0 %v288
  %1537 = vmatpush.msra.mxu0 %v284
  %1538 = vmatpush.msra.mxu0 %v280
  %1539 = vmatpush.msra.mxu0 %v276
  %1540 = vmatpush.msra.mxu0 %v272
  %1541 = vmatpush.msra.mxu0 %v268
  %1542 = vmatpush.msra.mxu0 %v264
  %1543 = vmatpush.msra.mxu0 %v260
  %1544 = vmatpush.msra.mxu0 %v256
  %1545 = vmatpush.msra.mxu0 %v252
  %1546 = vmatpush.msra.mxu0 %v248
  %1547 = vmatmul.f32.gmra.mxu0 %v1466
  %v1548 = vpop.f32.mrf.mxu0
  %v1549 = vadd.f32 0.0, %v1548
  %1550 = vdwg.mxu0
  %v1555 = vrot.slane %v1509, 6
  %v1556 = vrot.slane %v1529, 4
  %v1557 = vrot.slane %v1549, 2
  %v1558 = vsel %vm193, %v1489, %v1555
  %v1559 = vsel %vm195, %v1556, %v1557
  %v1560 = vsel %vm197, %v1558, %v1559
  %v1562 = vadd.f32 %v1470, %v1560
  %v1563 = vxor.u32 %v1562, 2147483648
  %v1564 = vmul.f32 %v1563, 1.442695
  %v1565 = vpow.pop %v1564
  %v1566 = vadd.f32 %v1565, 1.0
  %v1567 = vrcp.pop %v1566
  %v1568 = vmul.f32 %v1566, %v1567
  %v1569 = vsub.f32 1.0, %v1568
  %v1570 = vmul.f32 %v1567, %v1569
  %v1571 = vadd.f32 %v1567, %v1570
  %vm1572 = vweird.f32 %v1566
  %vm1573 = vweird.f32 %v1567
  %vm1574 = vmor %vm1572, %vm1573
  %v1575 = vsel %vm1574, %v1567, %v1571
  %v1576 = vand.u32 2147483647, %v1566
  %vm1577 = vcmp.eq.f32.partialorder %v1576, 8.507059e+37
  %v1578 = vand.u32 %v1566, 2147483648
  %v1579 = vor.u32 1.1754944e-38, %v1578
  %v1580 = vsel %vm1577, %v1579, %v1575
  %v1581 = vmul.f32 1.0, %v1580
  %v1583 = vrot.slane %v1562, 2
  %v1585 = vxor.u32 %v1583, 2147483648
  %v1586 = vmul.f32 %v1585, 1.442695
  %v1587 = vpow.pop %v1586
  %v1588 = vadd.f32 %v1587, 1.0
  %v1589 = vrcp.pop %v1588
  %v1590 = vmul.f32 %v1588, %v1589
  %v1591 = vsub.f32 1.0, %v1590
  %v1592 = vmul.f32 %v1589, %v1591
  %v1593 = vadd.f32 %v1589, %v1592
  %vm1594 = vweird.f32 %v1588
  %vm1595 = vweird.f32 %v1589
  %vm1596 = vmor %vm1594, %vm1595
  %v1597 = vsel %vm1596, %v1589, %v1593
  %v1598 = vand.u32 2147483647, %v1588
  %vm1599 = vcmp.eq.f32.partialorder %v1598, 8.507059e+37
  %v1600 = vand.u32 %v1588, 2147483648
  %v1601 = vor.u32 1.1754944e-38, %v1600
  %v1602 = vsel %vm1599, %v1601, %v1597
  %v1603 = vmul.f32 1.0, %v1602
  %v1604 = vrot.slane %v1562, 4
  %v1606 = vtanh.pop %v1604
  %v1607 = vrot.slane %v1562, 6
  %v1609 = vxor.u32 %v1607, 2147483648
  %v1610 = vmul.f32 %v1609, 1.442695
  %v1611 = vpow.pop %v1610
  %v1612 = vadd.f32 %v1611, 1.0
  %v1613 = vrcp.pop %v1612
  %v1614 = vmul.f32 %v1612, %v1613
  %v1615 = vsub.f32 1.0, %v1614
  %v1616 = vmul.f32 %v1613, %v1615
  %v1617 = vadd.f32 %v1613, %v1616
  %vm1618 = vweird.f32 %v1612
  %vm1619 = vweird.f32 %v1613
  %vm1620 = vmor %vm1618, %vm1619
  %v1621 = vsel %vm1620, %v1613, %v1617
  %v1622 = vand.u32 2147483647, %v1612
  %vm1623 = vcmp.eq.f32.partialorder %v1622, 8.507059e+37
  %v1624 = vand.u32 %v1612, 2147483648
  %v1625 = vor.u32 1.1754944e-38, %v1624
  %v1626 = vsel %vm1623, %v1625, %v1621
  %v1627 = vmul.f32 1.0, %v1626
  %v1628 = vmul.f32 %v1603, %v1464
  %v1629 = vmul.f32 %v1581, %v1606
  %v1630 = vadd.f32 %v1628, %v1629
  %v1631 = vtanh.pop %v1630
  %v1632 = vmul.f32 %v1627, %v1631
  %s1633 = scalar_lea.vmem [#allocation3], 14
  %1634 = vst [vmem:[%s1633] sm:$0x3] %v1632
  %v1635 = vld [vmem:[#allocation3] sm:$0x3]
  %v1636 = vld [vmem:[#allocation3 + $0x2] sm:$0x3]
  %v1637 = vld [vmem:[#allocation3 + $0x4] sm:$0x3]
  %v1638 = vld [vmem:[#allocation3 + $0x6] sm:$0x3]
  %v1639 = vld [vmem:[#allocation3 + $0x8] sm:$0x3]
  %v1640 = vld [vmem:[#allocation3 + $0xa] sm:$0x3]
  %v1641 = vld [vmem:[#allocation3 + $0xc] sm:$0x3]
  %v1642 = vld [vmem:[#allocation3 + $0xe] sm:$0x3]
  %v1643 = vld [vmem:[%s4] sm:$0xff]
  %v1644 = vld [vmem:[%s4 + $0x8] sm:$0xff]
  %v1645 = vld [vmem:[%s4 + $0x10] sm:$0xff]
  %v1646 = vld [vmem:[%s4 + $0x18] sm:$0xff]
  %v1647 = vld [vmem:[%s4 + $0x20] sm:$0xff]
  %v1648 = vld [vmem:[%s4 + $0x28] sm:$0xff]
  %v1649 = vld [vmem:[%s4 + $0x30] sm:$0xff]
  %v1650 = vld [vmem:[%s4 + $0x38] sm:$0xff]
  %v1651 = vld [vmem:[%s4 + $0x40] sm:$0xff]
  %v1652 = vld [vmem:[%s4 + $0x48] sm:$0xff]
  %v1653 = vld [vmem:[%s4 + $0x50] sm:$0xff]
  %v1654 = vld [vmem:[%s4 + $0x58] sm:$0xff]
  %v1655 = vld [vmem:[%s4 + $0x60] sm:$0xff]
  %v1656 = vld [vmem:[%s4 + $0x68] sm:$0xff]
  %v1657 = vld [vmem:[%s4 + $0x70] sm:$0xff]
  %v1658 = vld [vmem:[%s4 + $0x78] sm:$0xff]
  %v1659 = vld [vmem:[%s5] sm:$0x1]
  %v1661 = vperm.slane %v1659, 0
  %1671 = vst [vmem:[#allocation1] ss:$4 sm:$0xff] %v1635
  %s1672 = scalar_lea.vmem [#allocation1], 1
  %1673 = vst [vmem:[%s1672] ss:$4 sm:$0xff] %v1636
  %s1674 = scalar_lea.vmem [#allocation1], 2
  %1675 = vst [vmem:[%s1674] ss:$4 sm:$0xff] %v1637
  %s1676 = scalar_lea.vmem [#allocation1], 3
  %1677 = vst [vmem:[%s1676] ss:$4 sm:$0xff] %v1638
  %s1678 = scalar_lea.vmem [#allocation1], 32
  %1679 = vst [vmem:[%s1678] ss:$4 sm:$0xff] %v1639
  %s1680 = scalar_lea.vmem [#allocation1], 33
  %1681 = vst [vmem:[%s1680] ss:$4 sm:$0xff] %v1640
  %s1682 = scalar_lea.vmem [#allocation1], 34
  %1683 = vst [vmem:[%s1682] ss:$4 sm:$0xff] %v1641
  %s1684 = scalar_lea.vmem [#allocation1], 35
  %1685 = vst [vmem:[%s1684] ss:$4 sm:$0xff] %v1642
  %v1686 = vld.sshfl [vmem:[#allocation1] sm:$0xff pattern:$0x73625140]
  %v1687 = vld.sshfl [vmem:[#allocation1 + $0x20] sm:$0xff pattern:$0x73625140]
  %1690 = vmatpush.msra.mxu0 %v1658
  %1691 = vmatpush.msra.mxu0 %v1657
  %1692 = vmatpush.msra.mxu0 %v1656
  %1693 = vmatpush.msra.mxu0 %v1655
  %1694 = vmatpush.msra.mxu0 %v1654
  %1695 = vmatpush.msra.mxu0 %v1653
  %1696 = vmatpush.msra.mxu0 %v1652
  %1697 = vmatpush.msra.mxu0 %v1651
  %1698 = vmatpush.msra.mxu0 %v1650
  %1699 = vmatpush.msra.mxu0 %v1649
  %1700 = vmatpush.msra.mxu0 %v1648
  %1701 = vmatpush.msra.mxu0 %v1647
  %1702 = vmatpush.msra.mxu0 %v1646
  %1703 = vmatpush.msra.mxu0 %v1645
  %1704 = vmatpush.msra.mxu0 %v1644
  %1705 = vmatpush.msra.mxu0 %v1643
  %1706 = vmatmul.f32.gmra.mxu0 %v1686
  %v1707 = vpop.f32.mrf.mxu0
  %v1708 = vadd.f32 %v1661, %v1707
  %1709 = vmatmul.f32.gmra.mxu0 %v1687
  %v1710 = vpop.f32.mrf.mxu0
  %v1711 = vadd.f32 %v1661, %v1710
  %1712 = vdwg.mxu0
  %v1715 = vrot.slane %v1708, 2
  %v1716 = vrot.slane %v1708, 4
  %v1717 = vrot.slane %v1708, 6
  %v1718 = vrot.slane %v1711, 2
  %v1719 = vrot.slane %v1711, 4
  %v1720 = vrot.slane %v1711, 6
  %vm1727 = vcmask 58368
  %1728 = vst.msk [vmem:[%s6] sm:$0x3] %vm1727, %v1708
  %1729 = vst.msk [vmem:[%s6 + $0x2] sm:$0x3] %vm1727, %v1715
  %1730 = vst.msk [vmem:[%s6 + $0x4] sm:$0x3] %vm1727, %v1716
  %1731 = vst.msk [vmem:[%s6 + $0x6] sm:$0x3] %vm1727, %v1717
  %1732 = vst.msk [vmem:[%s6 + $0x8] sm:$0x3] %vm1727, %v1711
  %1733 = vst.msk [vmem:[%s6 + $0xa] sm:$0x3] %vm1727, %v1718
  %1734 = vst.msk [vmem:[%s6 + $0xc] sm:$0x3] %vm1727, %v1719
  %1735 = vst.msk [vmem:[%s6 + $0xe] sm:$0x3] %vm1727, %v1720
  // Predicated region
  $region26: #{lstm_model_forward.3} parent=0 // pred_check
    _
  $region27: #{lstm_model_forward.3} parent=0 // pred_check_branch
    %1737 = sbr.rel (0) target = $region29
  $region28: #{lstm_model_forward.3} parent=0 // pred_region
    _
  $region29: #{lstm_model_forward.3} parent=0 // pred_fallthru
    _
  // Predicated region
  $region30: #{lstm_model_forward.3} parent=0 // pred_check
    _
  $region31: #{lstm_model_forward.3} parent=0 // pred_check_branch
    %1739 = sbr.rel (0) target = $region33
  $region32: #{lstm_model_forward.3} parent=0 // pred_region
    _
  $region33: #{lstm_model_forward.3} parent=0 // pred_fallthru
    _

</llo_original>
